<compile_context>
chip_gen: v7x
topology: tpu7x:2x2x1
jax: 0.10.0
libtpu: 0.0.40
codegen_flags: <defaults>
</compile_context>

<pallas_src>
import functools

import jax
import jax.numpy as jnp
from jax import lax
from jax.experimental import pallas as pl
from jax.experimental.pallas import tpu as pltpu

LANES = 128
SUBLANES = 8
_FIN_CH = 32          # row-chunk for the finalize (bisection) passes


def _round_up(x, m):
    return ((x + m - 1) // m) * m


def _loss_kernel(y_ref, yh_ref, m_ref, out_ref,
                 d2_ref, acc_abs_ref, acc_sq_ref,
                 *, tc, sub, ch, rows_valid, rows_pad, topk):
    """Grid = (B, C // tc): axis 0 parallel (batch row), axis 1 arbitrary
    (channel-tile reduction carry).  Each step holds `tc` channels of one
    batch row; d^2 is streamed into a whole-row VMEM scratch that the final
    channel tile radix-selects over."""
    j = pl.program_id(1)
    nj = pl.num_programs(1)

    # ----------------------- init (first tile of this row) -------------------
    @pl.when(j == 0)
    def _init():
        acc_abs_ref[...] = jnp.zeros_like(acc_abs_ref)
        acc_sq_ref[...] = jnp.zeros_like(acc_sq_ref)
        if rows_pad > rows_valid:
            # zero padding rows: exact for the top-k because d^2 >= 0
            d2_ref[rows_valid:rows_pad, :] = jnp.zeros(
                (rows_pad - rows_valid, LANES), jnp.float32)

    # ------------- elementwise hot path: d = (y - yh) * m --------------------
    base = j * (tc * sub)          # global row offset of this tile in d2_ref
    n_r = sub // ch
    c_unroll = max(1, min(4, tc))

    def r_body(r, carry):
        acc_a, acc_s = carry
        r0 = pl.multiple_of(r * ch, ch)
        mv = m_ref[0, pl.ds(r0, ch), :].astype(jnp.float32)  # reused per channel

        def c_body(c, carry2):
            a2, s2 = carry2
            g0 = pl.multiple_of(c * sub + r0, ch)            # local row in tile
            yv = y_ref[0, pl.ds(g0, ch), :].astype(jnp.float32)
            yhv = yh_ref[0, pl.ds(g0, ch), :].astype(jnp.float32)
            d = (yv - yhv) * mv
            d2 = d * d
            d2_ref[pl.ds(pl.multiple_of(base + g0, ch), ch), :] = d2
            return a2 + jnp.abs(d), s2 + d2

        return lax.fori_loop(0, tc, c_body, (acc_a, acc_s), unroll=c_unroll)

    zero = jnp.zeros((ch, LANES), jnp.float32)
    acc_a, acc_s = lax.fori_loop(0, n_r, r_body, (zero, zero))
    acc_abs_ref[...] = acc_abs_ref[...] + acc_a
    acc_sq_ref[...] = acc_sq_ref[...] + acc_s

    # ---- finalize: radix-select top-k threshold + emit per-row partials -----
    @pl.when(j == nj - 1)
    def _finalize():
        n_fin = rows_pad // _FIN_CH
        fin_unroll = max(1, min(4, n_fin))

        def count_ge(tbits):
            # count of elements whose f32 bit pattern >= tbits (pure VPU).
            # f32 lane counts are exact (<= 2^24 since the scratch fits VMEM).
            def body(r, cntv):
                r0 = pl.multiple_of(r * _FIN_CH, _FIN_CH)
                bits = pltpu.bitcast(d2_ref[pl.ds(r0, _FIN_CH), :], jnp.int32)
                return cntv + jnp.where(bits >= tbits,
                                        jnp.float32(1.0), jnp.float32(0.0))
            cntv = lax.fori_loop(0, n_fin, body,
                                 jnp.zeros((_FIN_CH, LANES), jnp.float32),
                                 unroll=fin_unroll)
            return jnp.sum(cntv)

        # Greedy bit-by-bit maximization of t s.t. count(d^2 >= t) >= K.
        # Bit patterns of non-negative f32 order like the values, so the
        # result is exactly the K-th largest d^2 (31 data passes).
        tbits = jnp.int32(0)
        for b in range(30, -1, -1):
            cand = tbits + jnp.int32(1 << b)      # lower bits of tbits are 0
            tbits = jnp.where(count_ge(cand) >= jnp.float32(topk), cand, tbits)

        # One combined pass: sum and count of values >= threshold.
        def fin_body(r, carry):
            sumv, cntv = carry
            r0 = pl.multiple_of(r * _FIN_CH, _FIN_CH)
            d2c = d2_ref[pl.ds(r0, _FIN_CH), :]
            ge = pltpu.bitcast(d2c, jnp.int32) >= tbits
            sumv = sumv + jnp.where(ge, d2c, jnp.float32(0.0))
            cntv = cntv + jnp.where(ge, jnp.float32(1.0), jnp.float32(0.0))
            return sumv, cntv

        sumv, cntv = lax.fori_loop(
            0, n_fin, fin_body,
            (jnp.zeros((_FIN_CH, LANES), jnp.float32),
             jnp.zeros((_FIN_CH, LANES), jnp.float32)),
            unroll=fin_unroll)
        sum_ge = jnp.sum(sumv)
        cnt_ge = jnp.sum(cntv)
        t = jnp.max(pltpu.bitcast(
            jnp.full((_FIN_CH, LANES), tbits, jnp.int32), jnp.float32))
        # sum of K largest = sum(>t) + (K - count(>t))*t = sum(>=t) - (cnt-K)*t
        topk_sum = sum_ge - (cnt_ge - jnp.float32(topk)) * t

        a = jnp.sum(acc_abs_ref[...])
        q = jnp.sum(acc_sq_ref[...])

        sub_i = lax.broadcasted_iota(jnp.int32, (SUBLANES, LANES), 0)
        ln_i = lax.broadcasted_iota(jnp.int32, (SUBLANES, LANES), 1)
        vals = jnp.where((sub_i == 0) & (ln_i == 0), a, jnp.float32(0.0))
        vals = jnp.where((sub_i == 0) & (ln_i == 1), q, vals)
        vals = jnp.where((sub_i == 0) & (ln_i == 2), topk_sum, vals)
        out_ref[0] = vals


def multinorm_reconstruction_loss(y, yh, mask, *, l1=0.0, l2=1.0,
                                  linf=0.02, linf_topk=2048):
    """Pallas TPU implementation of MultiNormReconstructionLoss.forward."""
    B, C, H, W = y.shape
    assert yh.shape == y.shape
    HW = H * W
    D = C * HW
    K = int(linf_topk)
    assert 1 <= K <= D, "linf_topk must not exceed the flattened feature dim"

    HW_pad = _round_up(HW, LANES)
    SUB = HW_pad // LANES
    itemsize = jnp.dtype(y.dtype).itemsize

    # ------- layout (B, C*SUB, 128); zero spatial pad is exact (d == 0) ------
    def prep(x):
        x = x.reshape(B, C, HW)
        if HW_pad != HW:
            x = jnp.pad(x, ((0, 0), (0, 0), (0, HW_pad - HW)))
        return x.reshape(B, C * SUB, LANES)

    y3 = prep(y)          # original dtype; the f32 cast happens on the VPU
    yh3 = prep(yh)

    # Spatial-only mask: kept un-broadcast over C in HBM, broadcast in-kernel.
    # TODO(synk): per-channel masks (mask.shape[1] == C > 1) would need a
    # C-tiled mask BlockSpec; the reference usage is spatial-only.
    mask_b = jnp.broadcast_to(mask, (B, 1, H, W)).astype(y.dtype)
    m2 = mask_b.reshape(B, HW)
    if HW_pad != HW:
        m2 = jnp.pad(m2, ((0, 0), (0, HW_pad - HW)))
    m3 = m2.reshape(B, SUB, LANES)

    # elementwise chunk rows (bounded vreg live ranges); must divide SUB
    CH = 1
    for c in (32, 16, 8, 4, 2, 1):
        if SUB % c == 0:
            CH = c
            break

    ROWS = C * SUB
    ROWS_PAD = _round_up(ROWS, _FIN_CH)

    # ----------------- per-generation VMEM budget / limit --------------------
    try:
        vmem_cap = int(pltpu.get_tpu_info().vmem_capacity_bytes)
    except Exception:
        vmem_cap = 64 * 1024 * 1024               # conservative (v7x-sized)
    if vmem_cap >= 100 * 1024 * 1024:             # v5e / v6e: 128 MiB physical
        budget = 48 * 1024 * 1024
        vmem_limit = 96 * 1024 * 1024
    else:                                         # v7x: 64 MiB physical
        budget = 24 * 1024 * 1024
        vmem_limit = 40 * 1024 * 1024

    d2_bytes = ROWS_PAD * LANES * 4
    fixed = (d2_bytes                             # whole-row d^2 scratch
             + 2 * CH * LANES * 4                 # vector accumulators
             + 2 * SUBLANES * LANES * 4)          # double-buffered output block
    # TODO(synk): if the whole-row d^2 scratch ever exceeds the budget, switch
    # the top-k to a second streaming pass over HBM instead of VMEM residency.
    assert fixed + 6 * SUB * LANES * itemsize <= budget, (
        "per-batch-row d^2 scratch does not fit the VMEM budget")

    # channels per tile: largest divisor of C fitting the budget with
    # double-buffered y/yh (+ mask), keeping the block 8-row aligned.
    valid = [d for d in range(1, C + 1)
             if C % d == 0 and ((d * SUB) % SUBLANES == 0 or d == C)]
    tc = valid[0]
    for cand in valid:
        need = fixed + (4 * cand + 2) * SUB * LANES * itemsize
        if need <= budget:
            tc = cand
    num_ct = C // tc

    kernel = functools.partial(
        _loss_kernel, tc=tc, sub=SUB, ch=CH,
        rows_valid=ROWS, rows_pad=ROWS_PAD, topk=K)

    # streaming cost estimate (top-k is now ~32 VMEM passes, not K pool scans)
    flops = 6 * B * C * HW_pad + 2 * 32 * B * ROWS_PAD * LANES
    bytes_accessed = (2 * B * C * HW_pad * itemsize     # y + yh
                      + B * HW_pad * itemsize           # mask (no C broadcast)
                      + B * SUBLANES * LANES * 4)       # partial-sum output

    # TODO(synk): on v7x with very small B, split the channel axis into two
    # "parallel" halves (per-half top-k candidates merged in the wrapper) so
    # both TensorCores get work; not done here.
    out = pl.pallas_call(
        kernel,
        out_shape=jax.ShapeDtypeStruct((B, SUBLANES, LANES), jnp.float32),
        grid=(B, num_ct),
        in_specs=[
            pl.BlockSpec((1, tc * SUB, LANES), lambda b, j: (b, j, 0)),
            pl.BlockSpec((1, tc * SUB, LANES), lambda b, j: (b, j, 0)),
            # resident spatial mask (block index ignores the channel tile)
            # TODO(synk): pl.Buffered(1) on this spec would reclaim its second
            # buffer on v7x; left double-buffered for lowering safety.
            pl.BlockSpec((1, SUB, LANES), lambda b, j: (b, 0, 0)),
        ],
        out_specs=pl.BlockSpec((1, SUBLANES, LANES), lambda b, j: (b, 0, 0)),
        scratch_shapes=[
            pltpu.VMEM((ROWS_PAD, LANES), jnp.float32),   # whole-row d^2
            pltpu.VMEM((CH, LANES), jnp.float32),         # sum |d| accumulator
            pltpu.VMEM((CH, LANES), jnp.float32),         # sum d^2 accumulator
        ],
        compiler_params=pltpu.CompilerParams(
            dimension_semantics=("parallel", "arbitrary"),
            vmem_limit_bytes=vmem_limit),
        cost_estimate=pl.CostEstimate(
            flops=int(flops), transcendentals=0,
            bytes_accessed=int(bytes_accessed)),
    )(y3, yh3, m3)

    # tiny final combine of per-batch-row partial sums (XLA side)
    n_elems = jnp.float32(B * D)
    sum_abs = jnp.sum(out[:, 0, 0])
    sum_sq = jnp.sum(out[:, 0, 1])
    topk_sum = jnp.sum(out[:, 0, 2])
    return (l1 * sum_abs / n_elems
            + l2 * sum_sq / n_elems
            + linf * topk_sum / jnp.float32(B))


def reference_loss(y, yh, mask, *, l1, l2, linf, linf_topk):
    """Pure-JAX reference mirroring the PyTorch forward."""
    B = y.shape[0]
    ym = (y * mask).reshape(B, -1)
    yhm = (yh * mask).reshape(B, -1)
    d = ym - yhm
    l1_term = jnp.mean(jnp.abs(d))                       # F.l1_loss(..., 'mean')
    l2_term = jnp.mean(d * d)                            # F.mse_loss(..., 'mean')
    topk_vals = lax.top_k(d * d, linf_topk)[0]           # (B, k)
    linf_term = jnp.sum(jnp.mean(topk_vals, axis=0))     # .mean(0).sum()
    return l1 * l1_term + l2 * l2_term + linf * linf_term


if __name__ == "__main__":
    # Small shapes: B=2, C=4, H=W=16 -> flattened D = 1024; use linf_topk=128.
    B, C, H, W = 2, 4, 16, 16
    l1, l2, linf, linf_topk = 0.1, 1.0, 0.02, 128

    key = jax.random.PRNGKey(0)
    ky, kyh, km = jax.random.split(key, 3)
    y = jax.random.normal(ky, (B, C, H, W), dtype=jnp.float32)
    yh = jax.random.normal(kyh, (B, C, H, W), dtype=jnp.float32)
    mask = jax.random.bernoulli(km, 0.8, (B, 1, H, W)).astype(jnp.float32)

    loss = multinorm_reconstruction_loss(
        y, yh, mask, l1=l1, l2=l2, linf=linf, linf_topk=linf_topk)
    loss = jax.block_until_ready(loss)

    ref = jax.block_until_ready(
        reference_loss(y, yh, mask, l1=l1, l2=l2, linf=linf,
                       linf_topk=linf_topk))

    assert jnp.allclose(loss, ref, rtol=1e-3, atol=1e-5), (loss, ref)
    print("KERNEL_OK")
</pallas_src>

<mosaic_0001>
module attributes {stable_mosaic.version = 11 : i64} {
  func.func @_loss_kernel(%arg0: i32, %arg1: i32, %arg2: memref<1x8x128xf32, #tpu.memory_space<vmem>>, %arg3: memref<1x8x128xf32, #tpu.memory_space<vmem>>, %arg4: memref<1x2x128xf32, #tpu.memory_space<vmem>>, %arg5: memref<1x8x128xf32, #tpu.memory_space<vmem>>, %arg6: memref<32x128xf32, #tpu.memory_space<vmem>>, %arg7: memref<2x128xf32, #tpu.memory_space<vmem>>, %arg8: memref<2x128xf32, #tpu.memory_space<vmem>>) attributes {dimension_semantics = [#tpu.dimension_semantics<parallel>, #tpu.dimension_semantics<arbitrary>], iteration_bounds = array<i64: 2, 1>, scalar_prefetch = 0 : i64, scratch_operands = 3 : i64, tpu.core_type = #tpu.core_type<tc>, window_params = [{transform_indices = @transform_0, window_bounds = array<i64: 1, 8, 128>}, {transform_indices = @transform_1, window_bounds = array<i64: 1, 8, 128>}, {transform_indices = @transform_2, window_bounds = array<i64: 1, 2, 128>}, {transform_indices = @transform_3, window_bounds = array<i64: 1, 8, 128>}]} {
    %c0_i32 = arith.constant 0 : i32
    %0 = arith.cmpi eq, %arg1, %c0_i32 : i32
    %1 = arith.extui %0 : i1 to i32
    %c0_i32_0 = arith.constant 0 : i32
    %2 = arith.cmpi ne, %1, %c0_i32_0 : i32
    scf.if %2 {
      %cst_40 = arith.constant 0.000000e+00 : f32
      %95 = vector.broadcast %cst_40 : f32 to vector<2x128xf32>
      %c0_41 = arith.constant 0 : index
      %c0_42 = arith.constant 0 : index
      %96 = vector.load %arg7[%c0_41, %c0_42] : memref<2x128xf32, #tpu.memory_space<vmem>>, vector<2x128xf32>
      tpu.vector_store %arg7[%c0_41, %c0_42], %95 {strides = array<i32>} : memref<2x128xf32, #tpu.memory_space<vmem>>, vector<2x128xf32>,
      %cst_43 = arith.constant 0.000000e+00 : f32
      %97 = vector.broadcast %cst_43 : f32 to vector<2x128xf32>
      %c0_44 = arith.constant 0 : index
      %c0_45 = arith.constant 0 : index
      %98 = vector.load %arg8[%c0_44, %c0_45] : memref<2x128xf32, #tpu.memory_space<vmem>>, vector<2x128xf32>
      tpu.vector_store %arg8[%c0_44, %c0_45], %97 {strides = array<i32>} : memref<2x128xf32, #tpu.memory_space<vmem>>, vector<2x128xf32>,
      %cst_46 = arith.constant 0.000000e+00 : f32
      %99 = vector.broadcast %cst_46 : f32 to vector<24x128xf32>
      %c8 = arith.constant 8 : index
      %c0_47 = arith.constant 0 : index
      %100 = vector.load %arg6[%c8, %c0_47] : memref<32x128xf32, #tpu.memory_space<vmem>>, vector<24x128xf32>
      tpu.vector_store %arg6[%c8, %c0_47], %99 {strides = array<i32>} : memref<32x128xf32, #tpu.memory_space<vmem>>, vector<24x128xf32>,
    } else {
    }
    %c8_i32 = arith.constant 8 : i32
    %3 = arith.muli %arg1, %c8_i32 : i32
    %cst = arith.constant 0.000000e+00 : f32
    %4 = vector.broadcast %cst : f32 to vector<2x128xf32>
    %c0_i32_1 = arith.constant 0 : i32
    %c2_i32 = arith.constant 2 : i32
    %5 = arith.muli %c0_i32_1, %c2_i32 : i32
    %6 = tpu.assume_multiple %5, 2 : i32
    %c0 = arith.constant 0 : index
    %7 = arith.index_cast %6 : i32 to index
    %c0_2 = arith.constant 0 : index
    %8 = vector.load %arg4[%c0, %7, %c0_2] : memref<1x2x128xf32, #tpu.memory_space<vmem>>, vector<1x2x128xf32>
    %9 = vector.shape_cast %8 : vector<1x2x128xf32> to vector<2x128xf32>
    %c0_i32_3 = arith.constant 0 : i32
    %c2_i32_4 = arith.constant 2 : i32
    %10 = arith.muli %c0_i32_3, %c2_i32_4 : i32
    %11 = arith.addi %10, %6 : i32
    %12 = tpu.assume_multiple %11, 2 : i32
    %c0_5 = arith.constant 0 : index
    %13 = arith.index_cast %12 : i32 to index
    %c0_6 = arith.constant 0 : index
    %14 = vector.load %arg2[%c0_5, %13, %c0_6] : memref<1x8x128xf32, #tpu.memory_space<vmem>>, vector<1x2x128xf32>
    %15 = vector.shape_cast %14 : vector<1x2x128xf32> to vector<2x128xf32>
    %c0_7 = arith.constant 0 : index
    %16 = arith.index_cast %12 : i32 to index
    %c0_8 = arith.constant 0 : index
    %17 = vector.load %arg3[%c0_7, %16, %c0_8] : memref<1x8x128xf32, #tpu.memory_space<vmem>>, vector<1x2x128xf32>
    %18 = vector.shape_cast %17 : vector<1x2x128xf32> to vector<2x128xf32>
    %19 = arith.subf %15, %18 : vector<2x128xf32>
    %20 = arith.mulf %19, %9 : vector<2x128xf32>
    %21 = arith.mulf %20, %20 : vector<2x128xf32>
    %22 = arith.addi %3, %12 : i32
    %23 = tpu.assume_multiple %22, 2 : i32
    %24 = arith.index_cast %23 : i32 to index
    %c0_9 = arith.constant 0 : index
    %25 = vector.load %arg6[%24, %c0_9] : memref<32x128xf32, #tpu.memory_space<vmem>>, vector<2x128xf32>
    tpu.vector_store %arg6[%24, %c0_9], %21 {strides = array<i32>} : memref<32x128xf32, #tpu.memory_space<vmem>>, vector<2x128xf32>,
    %26 = math.absf %20 : vector<2x128xf32>
    %27 = arith.addf %4, %26 : vector<2x128xf32>
    %28 = arith.addf %4, %21 : vector<2x128xf32>
    %c1_i32 = arith.constant 1 : i32
    %c2_i32_10 = arith.constant 2 : i32
    %29 = arith.muli %c1_i32, %c2_i32_10 : i32
    %30 = arith.addi %29, %6 : i32
    %31 = tpu.assume_multiple %30, 2 : i32
    %c0_11 = arith.constant 0 : index
    %32 = arith.index_cast %31 : i32 to index
    %c0_12 = arith.constant 0 : index
    %33 = vector.load %arg2[%c0_11, %32, %c0_12] : memref<1x8x128xf32, #tpu.memory_space<vmem>>, vector<1x2x128xf32>
    %34 = vector.shape_cast %33 : vector<1x2x128xf32> to vector<2x128xf32>
    %c0_13 = arith.constant 0 : index
    %35 = arith.index_cast %31 : i32 to index
    %c0_14 = arith.constant 0 : index
    %36 = vector.load %arg3[%c0_13, %35, %c0_14] : memref<1x8x128xf32, #tpu.memory_space<vmem>>, vector<1x2x128xf32>
    %37 = vector.shape_cast %36 : vector<1x2x128xf32> to vector<2x128xf32>
    %38 = arith.subf %34, %37 : vector<2x128xf32>
    %39 = arith.mulf %38, %9 : vector<2x128xf32>
    %40 = arith.mulf %39, %39 : vector<2x128xf32>
    %41 = arith.addi %3, %31 : i32
    %42 = tpu.assume_multiple %41, 2 : i32
    %43 = arith.index_cast %42 : i32 to index
    %c0_15 = arith.constant 0 : index
    %44 = vector.load %arg6[%43, %c0_15] : memref<32x128xf32, #tpu.memory_space<vmem>>, vector<2x128xf32>
    tpu.vector_store %arg6[%43, %c0_15], %40 {strides = array<i32>} : memref<32x128xf32, #tpu.memory_space<vmem>>, vector<2x128xf32>,
    %45 = math.absf %39 : vector<2x128xf32>
    %46 = arith.addf %27, %45 : vector<2x128xf32>
    %47 = arith.addf %28, %40 : vector<2x128xf32>
    %c2_i32_16 = arith.constant 2 : i32
    %c2_i32_17 = arith.constant 2 : i32
    %48 = arith.muli %c2_i32_16, %c2_i32_17 : i32
    %49 = arith.addi %48, %6 : i32
    %50 = tpu.assume_multiple %49, 2 : i32
    %c0_18 = arith.constant 0 : index
    %51 = arith.index_cast %50 : i32 to index
    %c0_19 = arith.constant 0 : index
    %52 = vector.load %arg2[%c0_18, %51, %c0_19] : memref<1x8x128xf32, #tpu.memory_space<vmem>>, vector<1x2x128xf32>
    %53 = vector.shape_cast %52 : vector<1x2x128xf32> to vector<2x128xf32>
    %c0_20 = arith.constant 0 : index
    %54 = arith.index_cast %50 : i32 to index
    %c0_21 = arith.constant 0 : index
    %55 = vector.load %arg3[%c0_20, %54, %c0_21] : memref<1x8x128xf32, #tpu.memory_space<vmem>>, vector<1x2x128xf32>
    %56 = vector.shape_cast %55 : vector<1x2x128xf32> to vector<2x128xf32>
    %57 = arith.subf %53, %56 : vector<2x128xf32>
    %58 = arith.mulf %57, %9 : vector<2x128xf32>
    %59 = arith.mulf %58, %58 : vector<2x128xf32>
    %60 = arith.addi %3, %50 : i32
    %61 = tpu.assume_multiple %60, 2 : i32
    %62 = arith.index_cast %61 : i32 to index
    %c0_22 = arith.constant 0 : index
    %63 = vector.load %arg6[%62, %c0_22] : memref<32x128xf32, #tpu.memory_space<vmem>>, vector<2x128xf32>
    tpu.vector_store %arg6[%62, %c0_22], %59 {strides = array<i32>} : memref<32x128xf32, #tpu.memory_space<vmem>>, vector<2x128xf32>,
    %64 = math.absf %58 : vector<2x128xf32>
    %65 = arith.addf %46, %64 : vector<2x128xf32>
    %66 = arith.addf %47, %59 : vector<2x128xf32>
    %c3_i32 = arith.constant 3 : i32
    %c2_i32_23 = arith.constant 2 : i32
    %67 = arith.muli %c3_i32, %c2_i32_23 : i32
    %68 = arith.addi %67, %6 : i32
    %69 = tpu.assume_multiple %68, 2 : i32
    %c0_24 = arith.constant 0 : index
    %70 = arith.index_cast %69 : i32 to index
    %c0_25 = arith.constant 0 : index
    %71 = vector.load %arg2[%c0_24, %70, %c0_25] : memref<1x8x128xf32, #tpu.memory_space<vmem>>, vector<1x2x128xf32>
    %72 = vector.shape_cast %71 : vector<1x2x128xf32> to vector<2x128xf32>
    %c0_26 = arith.constant 0 : index
    %73 = arith.index_cast %69 : i32 to index
    %c0_27 = arith.constant 0 : index
    %74 = vector.load %arg3[%c0_26, %73, %c0_27] : memref<1x8x128xf32, #tpu.memory_space<vmem>>, vector<1x2x128xf32>
    %75 = vector.shape_cast %74 : vector<1x2x128xf32> to vector<2x128xf32>
    %76 = arith.subf %72, %75 : vector<2x128xf32>
    %77 = arith.mulf %76, %9 : vector<2x128xf32>
    %78 = arith.mulf %77, %77 : vector<2x128xf32>
    %79 = arith.addi %3, %69 : i32
    %80 = tpu.assume_multiple %79, 2 : i32
    %81 = arith.index_cast %80 : i32 to index
    %c0_28 = arith.constant 0 : index
    %82 = vector.load %arg6[%81, %c0_28] : memref<32x128xf32, #tpu.memory_space<vmem>>, vector<2x128xf32>
    tpu.vector_store %arg6[%81, %c0_28], %78 {strides = array<i32>} : memref<32x128xf32, #tpu.memory_space<vmem>>, vector<2x128xf32>,
    %83 = math.absf %77 : vector<2x128xf32>
    %84 = arith.addf %65, %83 : vector<2x128xf32>
    %85 = arith.addf %66, %78 : vector<2x128xf32>
    %c4_i32 = arith.constant 4 : i32
    %c1_i32_29 = arith.constant 1 : i32
    %c0_30 = arith.constant 0 : index
    %c0_31 = arith.constant 0 : index
    %86 = vector.load %arg7[%c0_30, %c0_31] : memref<2x128xf32, #tpu.memory_space<vmem>>, vector<2x128xf32>
    %87 = arith.addf %86, %84 : vector<2x128xf32>
    %c0_32 = arith.constant 0 : index
    %c0_33 = arith.constant 0 : index
    %88 = vector.load %arg7[%c0_32, %c0_33] : memref<2x128xf32, #tpu.memory_space<vmem>>, vector<2x128xf32>
    tpu.vector_store %arg7[%c0_32, %c0_33], %87 {strides = array<i32>} : memref<2x128xf32, #tpu.memory_space<vmem>>, vector<2x128xf32>,
    %c0_34 = arith.constant 0 : index
    %c0_35 = arith.constant 0 : index
    %89 = vector.load %arg8[%c0_34, %c0_35] : memref<2x128xf32, #tpu.memory_space<vmem>>, vector<2x128xf32>
    %90 = arith.addf %89, %85 : vector<2x128xf32>
    %c0_36 = arith.constant 0 : index
    %c0_37 = arith.constant 0 : index
    %91 = vector.load %arg8[%c0_36, %c0_37] : memref<2x128xf32, #tpu.memory_space<vmem>>, vector<2x128xf32>
    tpu.vector_store %arg8[%c0_36, %c0_37], %90 {strides = array<i32>} : memref<2x128xf32, #tpu.memory_space<vmem>>, vector<2x128xf32>,
    %c0_i32_38 = arith.constant 0 : i32
    %92 = arith.cmpi eq, %arg1, %c0_i32_38 : i32
    %93 = arith.extui %92 : i1 to i32
    %c0_i32_39 = arith.constant 0 : i32
    %94 = arith.cmpi ne, %93, %c0_i32_39 : i32
    scf.if %94 {
      %c0_i32_40 = arith.constant 0 : i32
      %c1073741824_i32 = arith.constant 1073741824 : i32
      %95 = arith.addi %c0_i32_40, %c1073741824_i32 : i32
      %cst_41 = arith.constant 0.000000e+00 : f32
      %96 = vector.broadcast %cst_41 : f32 to vector<32x128xf32>
      %c0_i32_42 = arith.constant 0 : i32
      %c32_i32 = arith.constant 32 : i32
      %97 = arith.muli %c0_i32_42, %c32_i32 : i32
      %98 = tpu.assume_multiple %97, 32 : i32
      %99 = arith.index_cast %98 : i32 to index
      %c0_43 = arith.constant 0 : index
      %100 = vector.load %arg6[%99, %c0_43] : memref<32x128xf32, #tpu.memory_space<vmem>>, vector<32x128xf32>
      %101 = tpu.bitcast %100 : vector<32x128xf32> -> vector<32x128xi32>
      %102 = vector.broadcast %95 : i32 to vector<32x128xi32>
      %103 = arith.cmpi sge, %101, %102 : vector<32x128xi32>
      %cst_44 = arith.constant 1.000000e+00 : f32
      %cst_45 = arith.constant 0.000000e+00 : f32
      %104 = vector.broadcast %cst_44 : f32 to vector<32x128xf32>
      %105 = vector.broadcast %cst_45 : f32 to vector<32x128xf32>
      %106 = arith.select %103, %104, %105 : vector<32x128xi1>, vector<32x128xf32>
      %107 = arith.addf %96, %106 : vector<32x128xf32>
      %c1_i32_46 = arith.constant 1 : i32
      %108 = vector.shape_cast %107 : vector<32x128xf32> to vector<1x32x128xf32>
      %cst_47 = arith.constant dense<0.000000e+00> : vector<1xf32>
      %109 = vector.multi_reduction <add>, %108, %cst_47 [1, 2] : vector<1x32x128xf32> to vector<1xf32>
      %110 = vector.shape_cast %109 : vector<1xf32> to vector<1x1x1xf32>
      %111 = vector.extract %110[0, 0, 0] : f32 from vector<1x1x1xf32>
      %cst_48 = arith.constant 1.280000e+02 : f32
      %112 = arith.cmpf oge, %111, %cst_48 : f32
      %c0_i32_49 = arith.constant 0 : i32
      %113 = arith.select %112, %95, %c0_i32_49 : i32
      %c536870912_i32 = arith.constant 536870912 : i32
      %114 = arith.addi %113, %c536870912_i32 : i32
      %cst_50 = arith.constant 0.000000e+00 : f32
      %115 = vector.broadcast %cst_50 : f32 to vector<32x128xf32>
      %c0_i32_51 = arith.constant 0 : i32
      %c32_i32_52 = arith.constant 32 : i32
      %116 = arith.muli %c0_i32_51, %c32_i32_52 : i32
      %117 = tpu.assume_multiple %116, 32 : i32
      %118 = arith.index_cast %117 : i32 to index
      %c0_53 = arith.constant 0 : index
      %119 = vector.load %arg6[%118, %c0_53] : memref<32x128xf32, #tpu.memory_space<vmem>>, vector<32x128xf32>
      %120 = tpu.bitcast %119 : vector<32x128xf32> -> vector<32x128xi32>
      %121 = vector.broadcast %114 : i32 to vector<32x128xi32>
      %122 = arith.cmpi sge, %120, %121 : vector<32x128xi32>
      %cst_54 = arith.constant 1.000000e+00 : f32
      %cst_55 = arith.constant 0.000000e+00 : f32
      %123 = vector.broadcast %cst_54 : f32 to vector<32x128xf32>
      %124 = vector.broadcast %cst_55 : f32 to vector<32x128xf32>
      %125 = arith.select %122, %123, %124 : vector<32x128xi1>, vector<32x128xf32>
      %126 = arith.addf %115, %125 : vector<32x128xf32>
      %c1_i32_56 = arith.constant 1 : i32
      %127 = vector.shape_cast %126 : vector<32x128xf32> to vector<1x32x128xf32>
      %cst_57 = arith.constant dense<0.000000e+00> : vector<1xf32>
      %128 = vector.multi_reduction <add>, %127, %cst_57 [1, 2] : vector<1x32x128xf32> to vector<1xf32>
      %129 = vector.shape_cast %128 : vector<1xf32> to vector<1x1x1xf32>
      %130 = vector.extract %129[0, 0, 0] : f32 from vector<1x1x1xf32>
      %cst_58 = arith.constant 1.280000e+02 : f32
      %131 = arith.cmpf oge, %130, %cst_58 : f32
      %132 = arith.select %131, %114, %113 : i32
      %c268435456_i32 = arith.constant 268435456 : i32
      %133 = arith.addi %132, %c268435456_i32 : i32
      %cst_59 = arith.constant 0.000000e+00 : f32
      %134 = vector.broadcast %cst_59 : f32 to vector<32x128xf32>
      %c0_i32_60 = arith.constant 0 : i32
      %c32_i32_61 = arith.constant 32 : i32
      %135 = arith.muli %c0_i32_60, %c32_i32_61 : i32
      %136 = tpu.assume_multiple %135, 32 : i32
      %137 = arith.index_cast %136 : i32 to index
      %c0_62 = arith.constant 0 : index
      %138 = vector.load %arg6[%137, %c0_62] : memref<32x128xf32, #tpu.memory_space<vmem>>, vector<32x128xf32>
      %139 = tpu.bitcast %138 : vector<32x128xf32> -> vector<32x128xi32>
      %140 = vector.broadcast %133 : i32 to vector<32x128xi32>
      %141 = arith.cmpi sge, %139, %140 : vector<32x128xi32>
      %cst_63 = arith.constant 1.000000e+00 : f32
      %cst_64 = arith.constant 0.000000e+00 : f32
      %142 = vector.broadcast %cst_63 : f32 to vector<32x128xf32>
      %143 = vector.broadcast %cst_64 : f32 to vector<32x128xf32>
      %144 = arith.select %141, %142, %143 : vector<32x128xi1>, vector<32x128xf32>
      %145 = arith.addf %134, %144 : vector<32x128xf32>
      %c1_i32_65 = arith.constant 1 : i32
      %146 = vector.shape_cast %145 : vector<32x128xf32> to vector<1x32x128xf32>
      %cst_66 = arith.constant dense<0.000000e+00> : vector<1xf32>
      %147 = vector.multi_reduction <add>, %146, %cst_66 [1, 2] : vector<1x32x128xf32> to vector<1xf32>
      %148 = vector.shape_cast %147 : vector<1xf32> to vector<1x1x1xf32>
      %149 = vector.extract %148[0, 0, 0] : f32 from vector<1x1x1xf32>
      %cst_67 = arith.constant 1.280000e+02 : f32
      %150 = arith.cmpf oge, %149, %cst_67 : f32
      %151 = arith.select %150, %133, %132 : i32
      %c134217728_i32 = arith.constant 134217728 : i32
      %152 = arith.addi %151, %c134217728_i32 : i32
      %cst_68 = arith.constant 0.000000e+00 : f32
      %153 = vector.broadcast %cst_68 : f32 to vector<32x128xf32>
      %c0_i32_69 = arith.constant 0 : i32
      %c32_i32_70 = arith.constant 32 : i32
      %154 = arith.muli %c0_i32_69, %c32_i32_70 : i32
      %155 = tpu.assume_multiple %154, 32 : i32
      %156 = arith.index_cast %155 : i32 to index
      %c0_71 = arith.constant 0 : index
      %157 = vector.load %arg6[%156, %c0_71] : memref<32x128xf32, #tpu.memory_space<vmem>>, vector<32x128xf32>
      %158 = tpu.bitcast %157 : vector<32x128xf32> -> vector<32x128xi32>
      %159 = vector.broadcast %152 : i32 to vector<32x128xi32>
      %160 = arith.cmpi sge, %158, %159 : vector<32x128xi32>
      %cst_72 = arith.constant 1.000000e+00 : f32
      %cst_73 = arith.constant 0.000000e+00 : f32
      %161 = vector.broadcast %cst_72 : f32 to vector<32x128xf32>
      %162 = vector.broadcast %cst_73 : f32 to vector<32x128xf32>
      %163 = arith.select %160, %161, %162 : vector<32x128xi1>, vector<32x128xf32>
      %164 = arith.addf %153, %163 : vector<32x128xf32>
      %c1_i32_74 = arith.constant 1 : i32
      %165 = vector.shape_cast %164 : vector<32x128xf32> to vector<1x32x128xf32>
      %cst_75 = arith.constant dense<0.000000e+00> : vector<1xf32>
      %166 = vector.multi_reduction <add>, %165, %cst_75 [1, 2] : vector<1x32x128xf32> to vector<1xf32>
      %167 = vector.shape_cast %166 : vector<1xf32> to vector<1x1x1xf32>
      %168 = vector.extract %167[0, 0, 0] : f32 from vector<1x1x1xf32>
      %cst_76 = arith.constant 1.280000e+02 : f32
      %169 = arith.cmpf oge, %168, %cst_76 : f32
      %170 = arith.select %169, %152, %151 : i32
      %c67108864_i32 = arith.constant 67108864 : i32
      %171 = arith.addi %170, %c67108864_i32 : i32
      %cst_77 = arith.constant 0.000000e+00 : f32
      %172 = vector.broadcast %cst_77 : f32 to vector<32x128xf32>
      %c0_i32_78 = arith.constant 0 : i32
      %c32_i32_79 = arith.constant 32 : i32
      %173 = arith.muli %c0_i32_78, %c32_i32_79 : i32
      %174 = tpu.assume_multiple %173, 32 : i32
      %175 = arith.index_cast %174 : i32 to index
      %c0_80 = arith.constant 0 : index
      %176 = vector.load %arg6[%175, %c0_80] : memref<32x128xf32, #tpu.memory_space<vmem>>, vector<32x128xf32>
      %177 = tpu.bitcast %176 : vector<32x128xf32> -> vector<32x128xi32>
      %178 = vector.broadcast %171 : i32 to vector<32x128xi32>
      %179 = arith.cmpi sge, %177, %178 : vector<32x128xi32>
      %cst_81 = arith.constant 1.000000e+00 : f32
      %cst_82 = arith.constant 0.000000e+00 : f32
      %180 = vector.broadcast %cst_81 : f32 to vector<32x128xf32>
      %181 = vector.broadcast %cst_82 : f32 to vector<32x128xf32>
      %182 = arith.select %179, %180, %181 : vector<32x128xi1>, vector<32x128xf32>
      %183 = arith.addf %172, %182 : vector<32x128xf32>
      %c1_i32_83 = arith.constant 1 : i32
      %184 = vector.shape_cast %183 : vector<32x128xf32> to vector<1x32x128xf32>
      %cst_84 = arith.constant dense<0.000000e+00> : vector<1xf32>
      %185 = vector.multi_reduction <add>, %184, %cst_84 [1, 2] : vector<1x32x128xf32> to vector<1xf32>
      %186 = vector.shape_cast %185 : vector<1xf32> to vector<1x1x1xf32>
      %187 = vector.extract %186[0, 0, 0] : f32 from vector<1x1x1xf32>
      %cst_85 = arith.constant 1.280000e+02 : f32
      %188 = arith.cmpf oge, %187, %cst_85 : f32
      %189 = arith.select %188, %171, %170 : i32
      %c33554432_i32 = arith.constant 33554432 : i32
      %190 = arith.addi %189, %c33554432_i32 : i32
      %cst_86 = arith.constant 0.000000e+00 : f32
      %191 = vector.broadcast %cst_86 : f32 to vector<32x128xf32>
      %c0_i32_87 = arith.constant 0 : i32
      %c32_i32_88 = arith.constant 32 : i32
      %192 = arith.muli %c0_i32_87, %c32_i32_88 : i32
      %193 = tpu.assume_multiple %192, 32 : i32
      %194 = arith.index_cast %193 : i32 to index
      %c0_89 = arith.constant 0 : index
      %195 = vector.load %arg6[%194, %c0_89] : memref<32x128xf32, #tpu.memory_space<vmem>>, vector<32x128xf32>
      %196 = tpu.bitcast %195 : vector<32x128xf32> -> vector<32x128xi32>
      %197 = vector.broadcast %190 : i32 to vector<32x128xi32>
      %198 = arith.cmpi sge, %196, %197 : vector<32x128xi32>
      %cst_90 = arith.constant 1.000000e+00 : f32
      %cst_91 = arith.constant 0.000000e+00 : f32
      %199 = vector.broadcast %cst_90 : f32 to vector<32x128xf32>
      %200 = vector.broadcast %cst_91 : f32 to vector<32x128xf32>
      %201 = arith.select %198, %199, %200 : vector<32x128xi1>, vector<32x128xf32>
      %202 = arith.addf %191, %201 : vector<32x128xf32>
      %c1_i32_92 = arith.constant 1 : i32
      %203 = vector.shape_cast %202 : vector<32x128xf32> to vector<1x32x128xf32>
      %cst_93 = arith.constant dense<0.000000e+00> : vector<1xf32>
      %204 = vector.multi_reduction <add>, %203, %cst_93 [1, 2] : vector<1x32x128xf32> to vector<1xf32>
      %205 = vector.shape_cast %204 : vector<1xf32> to vector<1x1x1xf32>
      %206 = vector.extract %205[0, 0, 0] : f32 from vector<1x1x1xf32>
      %cst_94 = arith.constant 1.280000e+02 : f32
      %207 = arith.cmpf oge, %206, %cst_94 : f32
      %208 = arith.select %207, %190, %189 : i32
      %c16777216_i32 = arith.constant 16777216 : i32
      %209 = arith.addi %208, %c16777216_i32 : i32
      %cst_95 = arith.constant 0.000000e+00 : f32
      %210 = vector.broadcast %cst_95 : f32 to vector<32x128xf32>
      %c0_i32_96 = arith.constant 0 : i32
      %c32_i32_97 = arith.constant 32 : i32
      %211 = arith.muli %c0_i32_96, %c32_i32_97 : i32
      %212 = tpu.assume_multiple %211, 32 : i32
      %213 = arith.index_cast %212 : i32 to index
      %c0_98 = arith.constant 0 : index
      %214 = vector.load %arg6[%213, %c0_98] : memref<32x128xf32, #tpu.memory_space<vmem>>, vector<32x128xf32>
      %215 = tpu.bitcast %214 : vector<32x128xf32> -> vector<32x128xi32>
      %216 = vector.broadcast %209 : i32 to vector<32x128xi32>
      %217 = arith.cmpi sge, %215, %216 : vector<32x128xi32>
      %cst_99 = arith.constant 1.000000e+00 : f32
      %cst_100 = arith.constant 0.000000e+00 : f32
      %218 = vector.broadcast %cst_99 : f32 to vector<32x128xf32>
      %219 = vector.broadcast %cst_100 : f32 to vector<32x128xf32>
      %220 = arith.select %217, %218, %219 : vector<32x128xi1>, vector<32x128xf32>
      %221 = arith.addf %210, %220 : vector<32x128xf32>
      %c1_i32_101 = arith.constant 1 : i32
      %222 = vector.shape_cast %221 : vector<32x128xf32> to vector<1x32x128xf32>
      %cst_102 = arith.constant dense<0.000000e+00> : vector<1xf32>
      %223 = vector.multi_reduction <add>, %222, %cst_102 [1, 2] : vector<1x32x128xf32> to vector<1xf32>
      %224 = vector.shape_cast %223 : vector<1xf32> to vector<1x1x1xf32>
      %225 = vector.extract %224[0, 0, 0] : f32 from vector<1x1x1xf32>
      %cst_103 = arith.constant 1.280000e+02 : f32
      %226 = arith.cmpf oge, %225, %cst_103 : f32
      %227 = arith.select %226, %209, %208 : i32
      %c8388608_i32 = arith.constant 8388608 : i32
      %228 = arith.addi %227, %c8388608_i32 : i32
      %cst_104 = arith.constant 0.000000e+00 : f32
      %229 = vector.broadcast %cst_104 : f32 to vector<32x128xf32>
      %c0_i32_105 = arith.constant 0 : i32
      %c32_i32_106 = arith.constant 32 : i32
      %230 = arith.muli %c0_i32_105, %c32_i32_106 : i32
      %231 = tpu.assume_multiple %230, 32 : i32
      %232 = arith.index_cast %231 : i32 to index
      %c0_107 = arith.constant 0 : index
      %233 = vector.load %arg6[%232, %c0_107] : memref<32x128xf32, #tpu.memory_space<vmem>>, vector<32x128xf32>
      %234 = tpu.bitcast %233 : vector<32x128xf32> -> vector<32x128xi32>
      %235 = vector.broadcast %228 : i32 to vector<32x128xi32>
      %236 = arith.cmpi sge, %234, %235 : vector<32x128xi32>
      %cst_108 = arith.constant 1.000000e+00 : f32
      %cst_109 = arith.constant 0.000000e+00 : f32
      %237 = vector.broadcast %cst_108 : f32 to vector<32x128xf32>
      %238 = vector.broadcast %cst_109 : f32 to vector<32x128xf32>
      %239 = arith.select %236, %237, %238 : vector<32x128xi1>, vector<32x128xf32>
      %240 = arith.addf %229, %239 : vector<32x128xf32>
      %c1_i32_110 = arith.constant 1 : i32
      %241 = vector.shape_cast %240 : vector<32x128xf32> to vector<1x32x128xf32>
      %cst_111 = arith.constant dense<0.000000e+00> : vector<1xf32>
      %242 = vector.multi_reduction <add>, %241, %cst_111 [1, 2] : vector<1x32x128xf32> to vector<1xf32>
      %243 = vector.shape_cast %242 : vector<1xf32> to vector<1x1x1xf32>
      %244 = vector.extract %243[0, 0, 0] : f32 from vector<1x1x1xf32>
      %cst_112 = arith.constant 1.280000e+02 : f32
      %245 = arith.cmpf oge, %244, %cst_112 : f32
      %246 = arith.select %245, %228, %227 : i32
      %c4194304_i32 = arith.constant 4194304 : i32
      %247 = arith.addi %246, %c4194304_i32 : i32
      %cst_113 = arith.constant 0.000000e+00 : f32
      %248 = vector.broadcast %cst_113 : f32 to vector<32x128xf32>
      %c0_i32_114 = arith.constant 0 : i32
      %c32_i32_115 = arith.constant 32 : i32
      %249 = arith.muli %c0_i32_114, %c32_i32_115 : i32
      %250 = tpu.assume_multiple %249, 32 : i32
      %251 = arith.index_cast %250 : i32 to index
      %c0_116 = arith.constant 0 : index
      %252 = vector.load %arg6[%251, %c0_116] : memref<32x128xf32, #tpu.memory_space<vmem>>, vector<32x128xf32>
      %253 = tpu.bitcast %252 : vector<32x128xf32> -> vector<32x128xi32>
      %254 = vector.broadcast %247 : i32 to vector<32x128xi32>
      %255 = arith.cmpi sge, %253, %254 : vector<32x128xi32>
      %cst_117 = arith.constant 1.000000e+00 : f32
      %cst_118 = arith.constant 0.000000e+00 : f32
      %256 = vector.broadcast %cst_117 : f32 to vector<32x128xf32>
      %257 = vector.broadcast %cst_118 : f32 to vector<32x128xf32>
      %258 = arith.select %255, %256, %257 : vector<32x128xi1>, vector<32x128xf32>
      %259 = arith.addf %248, %258 : vector<32x128xf32>
      %c1_i32_119 = arith.constant 1 : i32
      %260 = vector.shape_cast %259 : vector<32x128xf32> to vector<1x32x128xf32>
      %cst_120 = arith.constant dense<0.000000e+00> : vector<1xf32>
      %261 = vector.multi_reduction <add>, %260, %cst_120 [1, 2] : vector<1x32x128xf32> to vector<1xf32>
      %262 = vector.shape_cast %261 : vector<1xf32> to vector<1x1x1xf32>
      %263 = vector.extract %262[0, 0, 0] : f32 from vector<1x1x1xf32>
      %cst_121 = arith.constant 1.280000e+02 : f32
      %264 = arith.cmpf oge, %263, %cst_121 : f32
      %265 = arith.select %264, %247, %246 : i32
      %c2097152_i32 = arith.constant 2097152 : i32
      %266 = arith.addi %265, %c2097152_i32 : i32
      %cst_122 = arith.constant 0.000000e+00 : f32
      %267 = vector.broadcast %cst_122 : f32 to vector<32x128xf32>
      %c0_i32_123 = arith.constant 0 : i32
      %c32_i32_124 = arith.constant 32 : i32
      %268 = arith.muli %c0_i32_123, %c32_i32_124 : i32
      %269 = tpu.assume_multiple %268, 32 : i32
      %270 = arith.index_cast %269 : i32 to index
      %c0_125 = arith.constant 0 : index
      %271 = vector.load %arg6[%270, %c0_125] : memref<32x128xf32, #tpu.memory_space<vmem>>, vector<32x128xf32>
      %272 = tpu.bitcast %271 : vector<32x128xf32> -> vector<32x128xi32>
      %273 = vector.broadcast %266 : i32 to vector<32x128xi32>
      %274 = arith.cmpi sge, %272, %273 : vector<32x128xi32>
      %cst_126 = arith.constant 1.000000e+00 : f32
      %cst_127 = arith.constant 0.000000e+00 : f32
      %275 = vector.broadcast %cst_126 : f32 to vector<32x128xf32>
      %276 = vector.broadcast %cst_127 : f32 to vector<32x128xf32>
      %277 = arith.select %274, %275, %276 : vector<32x128xi1>, vector<32x128xf32>
      %278 = arith.addf %267, %277 : vector<32x128xf32>
      %c1_i32_128 = arith.constant 1 : i32
      %279 = vector.shape_cast %278 : vector<32x128xf32> to vector<1x32x128xf32>
      %cst_129 = arith.constant dense<0.000000e+00> : vector<1xf32>
      %280 = vector.multi_reduction <add>, %279, %cst_129 [1, 2] : vector<1x32x128xf32> to vector<1xf32>
      %281 = vector.shape_cast %280 : vector<1xf32> to vector<1x1x1xf32>
      %282 = vector.extract %281[0, 0, 0] : f32 from vector<1x1x1xf32>
      %cst_130 = arith.constant 1.280000e+02 : f32
      %283 = arith.cmpf oge, %282, %cst_130 : f32
      %284 = arith.select %283, %266, %265 : i32
      %c1048576_i32 = arith.constant 1048576 : i32
      %285 = arith.addi %284, %c1048576_i32 : i32
      %cst_131 = arith.constant 0.000000e+00 : f32
      %286 = vector.broadcast %cst_131 : f32 to vector<32x128xf32>
      %c0_i32_132 = arith.constant 0 : i32
      %c32_i32_133 = arith.constant 32 : i32
      %287 = arith.muli %c0_i32_132, %c32_i32_133 : i32
      %288 = tpu.assume_multiple %287, 32 : i32
      %289 = arith.index_cast %288 : i32 to index
      %c0_134 = arith.constant 0 : index
      %290 = vector.load %arg6[%289, %c0_134] : memref<32x128xf32, #tpu.memory_space<vmem>>, vector<32x128xf32>
      %291 = tpu.bitcast %290 : vector<32x128xf32> -> vector<32x128xi32>
      %292 = vector.broadcast %285 : i32 to vector<32x128xi32>
      %293 = arith.cmpi sge, %291, %292 : vector<32x128xi32>
      %cst_135 = arith.constant 1.000000e+00 : f32
      %cst_136 = arith.constant 0.000000e+00 : f32
      %294 = vector.broadcast %cst_135 : f32 to vector<32x128xf32>
      %295 = vector.broadcast %cst_136 : f32 to vector<32x128xf32>
      %296 = arith.select %293, %294, %295 : vector<32x128xi1>, vector<32x128xf32>
      %297 = arith.addf %286, %296 : vector<32x128xf32>
      %c1_i32_137 = arith.constant 1 : i32
      %298 = vector.shape_cast %297 : vector<32x128xf32> to vector<1x32x128xf32>
      %cst_138 = arith.constant dense<0.000000e+00> : vector<1xf32>
      %299 = vector.multi_reduction <add>, %298, %cst_138 [1, 2] : vector<1x32x128xf32> to vector<1xf32>
      %300 = vector.shape_cast %299 : vector<1xf32> to vector<1x1x1xf32>
      %301 = vector.extract %300[0, 0, 0] : f32 from vector<1x1x1xf32>
      %cst_139 = arith.constant 1.280000e+02 : f32
      %302 = arith.cmpf oge, %301, %cst_139 : f32
      %303 = arith.select %302, %285, %284 : i32
      %c524288_i32 = arith.constant 524288 : i32
      %304 = arith.addi %303, %c524288_i32 : i32
      %cst_140 = arith.constant 0.000000e+00 : f32
      %305 = vector.broadcast %cst_140 : f32 to vector<32x128xf32>
      %c0_i32_141 = arith.constant 0 : i32
      %c32_i32_142 = arith.constant 32 : i32
      %306 = arith.muli %c0_i32_141, %c32_i32_142 : i32
      %307 = tpu.assume_multiple %306, 32 : i32
      %308 = arith.index_cast %307 : i32 to index
      %c0_143 = arith.constant 0 : index
      %309 = vector.load %arg6[%308, %c0_143] : memref<32x128xf32, #tpu.memory_space<vmem>>, vector<32x128xf32>
      %310 = tpu.bitcast %309 : vector<32x128xf32> -> vector<32x128xi32>
      %311 = vector.broadcast %304 : i32 to vector<32x128xi32>
      %312 = arith.cmpi sge, %310, %311 : vector<32x128xi32>
      %cst_144 = arith.constant 1.000000e+00 : f32
      %cst_145 = arith.constant 0.000000e+00 : f32
      %313 = vector.broadcast %cst_144 : f32 to vector<32x128xf32>
      %314 = vector.broadcast %cst_145 : f32 to vector<32x128xf32>
      %315 = arith.select %312, %313, %314 : vector<32x128xi1>, vector<32x128xf32>
      %316 = arith.addf %305, %315 : vector<32x128xf32>
      %c1_i32_146 = arith.constant 1 : i32
      %317 = vector.shape_cast %316 : vector<32x128xf32> to vector<1x32x128xf32>
      %cst_147 = arith.constant dense<0.000000e+00> : vector<1xf32>
      %318 = vector.multi_reduction <add>, %317, %cst_147 [1, 2] : vector<1x32x128xf32> to vector<1xf32>
      %319 = vector.shape_cast %318 : vector<1xf32> to vector<1x1x1xf32>
      %320 = vector.extract %319[0, 0, 0] : f32 from vector<1x1x1xf32>
      %cst_148 = arith.constant 1.280000e+02 : f32
      %321 = arith.cmpf oge, %320, %cst_148 : f32
      %322 = arith.select %321, %304, %303 : i32
      %c262144_i32 = arith.constant 262144 : i32
      %323 = arith.addi %322, %c262144_i32 : i32
      %cst_149 = arith.constant 0.000000e+00 : f32
      %324 = vector.broadcast %cst_149 : f32 to vector<32x128xf32>
      %c0_i32_150 = arith.constant 0 : i32
      %c32_i32_151 = arith.constant 32 : i32
      %325 = arith.muli %c0_i32_150, %c32_i32_151 : i32
      %326 = tpu.assume_multiple %325, 32 : i32
      %327 = arith.index_cast %326 : i32 to index
      %c0_152 = arith.constant 0 : index
      %328 = vector.load %arg6[%327, %c0_152] : memref<32x128xf32, #tpu.memory_space<vmem>>, vector<32x128xf32>
      %329 = tpu.bitcast %328 : vector<32x128xf32> -> vector<32x128xi32>
      %330 = vector.broadcast %323 : i32 to vector<32x128xi32>
      %331 = arith.cmpi sge, %329, %330 : vector<32x128xi32>
      %cst_153 = arith.constant 1.000000e+00 : f32
      %cst_154 = arith.constant 0.000000e+00 : f32
      %332 = vector.broadcast %cst_153 : f32 to vector<32x128xf32>
      %333 = vector.broadcast %cst_154 : f32 to vector<32x128xf32>
      %334 = arith.select %331, %332, %333 : vector<32x128xi1>, vector<32x128xf32>
      %335 = arith.addf %324, %334 : vector<32x128xf32>
      %c1_i32_155 = arith.constant 1 : i32
      %336 = vector.shape_cast %335 : vector<32x128xf32> to vector<1x32x128xf32>
      %cst_156 = arith.constant dense<0.000000e+00> : vector<1xf32>
      %337 = vector.multi_reduction <add>, %336, %cst_156 [1, 2] : vector<1x32x128xf32> to vector<1xf32>
      %338 = vector.shape_cast %337 : vector<1xf32> to vector<1x1x1xf32>
      %339 = vector.extract %338[0, 0, 0] : f32 from vector<1x1x1xf32>
      %cst_157 = arith.constant 1.280000e+02 : f32
      %340 = arith.cmpf oge, %339, %cst_157 : f32
      %341 = arith.select %340, %323, %322 : i32
      %c131072_i32 = arith.constant 131072 : i32
      %342 = arith.addi %341, %c131072_i32 : i32
      %cst_158 = arith.constant 0.000000e+00 : f32
      %343 = vector.broadcast %cst_158 : f32 to vector<32x128xf32>
      %c0_i32_159 = arith.constant 0 : i32
      %c32_i32_160 = arith.constant 32 : i32
      %344 = arith.muli %c0_i32_159, %c32_i32_160 : i32
      %345 = tpu.assume_multiple %344, 32 : i32
      %346 = arith.index_cast %345 : i32 to index
      %c0_161 = arith.constant 0 : index
      %347 = vector.load %arg6[%346, %c0_161] : memref<32x128xf32, #tpu.memory_space<vmem>>, vector<32x128xf32>
      %348 = tpu.bitcast %347 : vector<32x128xf32> -> vector<32x128xi32>
      %349 = vector.broadcast %342 : i32 to vector<32x128xi32>
      %350 = arith.cmpi sge, %348, %349 : vector<32x128xi32>
      %cst_162 = arith.constant 1.000000e+00 : f32
      %cst_163 = arith.constant 0.000000e+00 : f32
      %351 = vector.broadcast %cst_162 : f32 to vector<32x128xf32>
      %352 = vector.broadcast %cst_163 : f32 to vector<32x128xf32>
      %353 = arith.select %350, %351, %352 : vector<32x128xi1>, vector<32x128xf32>
      %354 = arith.addf %343, %353 : vector<32x128xf32>
      %c1_i32_164 = arith.constant 1 : i32
      %355 = vector.shape_cast %354 : vector<32x128xf32> to vector<1x32x128xf32>
      %cst_165 = arith.constant dense<0.000000e+00> : vector<1xf32>
      %356 = vector.multi_reduction <add>, %355, %cst_165 [1, 2] : vector<1x32x128xf32> to vector<1xf32>
      %357 = vector.shape_cast %356 : vector<1xf32> to vector<1x1x1xf32>
      %358 = vector.extract %357[0, 0, 0] : f32 from vector<1x1x1xf32>
      %cst_166 = arith.constant 1.280000e+02 : f32
      %359 = arith.cmpf oge, %358, %cst_166 : f32
      %360 = arith.select %359, %342, %341 : i32
      %c65536_i32 = arith.constant 65536 : i32
      %361 = arith.addi %360, %c65536_i32 : i32
      %cst_167 = arith.constant 0.000000e+00 : f32
      %362 = vector.broadcast %cst_167 : f32 to vector<32x128xf32>
      %c0_i32_168 = arith.constant 0 : i32
      %c32_i32_169 = arith.constant 32 : i32
      %363 = arith.muli %c0_i32_168, %c32_i32_169 : i32
      %364 = tpu.assume_multiple %363, 32 : i32
      %365 = arith.index_cast %364 : i32 to index
      %c0_170 = arith.constant 0 : index
      %366 = vector.load %arg6[%365, %c0_170] : memref<32x128xf32, #tpu.memory_space<vmem>>, vector<32x128xf32>
      %367 = tpu.bitcast %366 : vector<32x128xf32> -> vector<32x128xi32>
      %368 = vector.broadcast %361 : i32 to vector<32x128xi32>
      %369 = arith.cmpi sge, %367, %368 : vector<32x128xi32>
      %cst_171 = arith.constant 1.000000e+00 : f32
      %cst_172 = arith.constant 0.000000e+00 : f32
      %370 = vector.broadcast %cst_171 : f32 to vector<32x128xf32>
      %371 = vector.broadcast %cst_172 : f32 to vector<32x128xf32>
      %372 = arith.select %369, %370, %371 : vector<32x128xi1>, vector<32x128xf32>
      %373 = arith.addf %362, %372 : vector<32x128xf32>
      %c1_i32_173 = arith.constant 1 : i32
      %374 = vector.shape_cast %373 : vector<32x128xf32> to vector<1x32x128xf32>
      %cst_174 = arith.constant dense<0.000000e+00> : vector<1xf32>
      %375 = vector.multi_reduction <add>, %374, %cst_174 [1, 2] : vector<1x32x128xf32> to vector<1xf32>
      %376 = vector.shape_cast %375 : vector<1xf32> to vector<1x1x1xf32>
      %377 = vector.extract %376[0, 0, 0] : f32 from vector<1x1x1xf32>
      %cst_175 = arith.constant 1.280000e+02 : f32
      %378 = arith.cmpf oge, %377, %cst_175 : f32
      %379 = arith.select %378, %361, %360 : i32
      %c32768_i32 = arith.constant 32768 : i32
      %380 = arith.addi %379, %c32768_i32 : i32
      %cst_176 = arith.constant 0.000000e+00 : f32
      %381 = vector.broadcast %cst_176 : f32 to vector<32x128xf32>
      %c0_i32_177 = arith.constant 0 : i32
      %c32_i32_178 = arith.constant 32 : i32
      %382 = arith.muli %c0_i32_177, %c32_i32_178 : i32
      %383 = tpu.assume_multiple %382, 32 : i32
      %384 = arith.index_cast %383 : i32 to index
      %c0_179 = arith.constant 0 : index
      %385 = vector.load %arg6[%384, %c0_179] : memref<32x128xf32, #tpu.memory_space<vmem>>, vector<32x128xf32>
      %386 = tpu.bitcast %385 : vector<32x128xf32> -> vector<32x128xi32>
      %387 = vector.broadcast %380 : i32 to vector<32x128xi32>
      %388 = arith.cmpi sge, %386, %387 : vector<32x128xi32>
      %cst_180 = arith.constant 1.000000e+00 : f32
      %cst_181 = arith.constant 0.000000e+00 : f32
      %389 = vector.broadcast %cst_180 : f32 to vector<32x128xf32>
      %390 = vector.broadcast %cst_181 : f32 to vector<32x128xf32>
      %391 = arith.select %388, %389, %390 : vector<32x128xi1>, vector<32x128xf32>
      %392 = arith.addf %381, %391 : vector<32x128xf32>
      %c1_i32_182 = arith.constant 1 : i32
      %393 = vector.shape_cast %392 : vector<32x128xf32> to vector<1x32x128xf32>
      %cst_183 = arith.constant dense<0.000000e+00> : vector<1xf32>
      %394 = vector.multi_reduction <add>, %393, %cst_183 [1, 2] : vector<1x32x128xf32> to vector<1xf32>
      %395 = vector.shape_cast %394 : vector<1xf32> to vector<1x1x1xf32>
      %396 = vector.extract %395[0, 0, 0] : f32 from vector<1x1x1xf32>
      %cst_184 = arith.constant 1.280000e+02 : f32
      %397 = arith.cmpf oge, %396, %cst_184 : f32
      %398 = arith.select %397, %380, %379 : i32
      %c16384_i32 = arith.constant 16384 : i32
      %399 = arith.addi %398, %c16384_i32 : i32
      %cst_185 = arith.constant 0.000000e+00 : f32
      %400 = vector.broadcast %cst_185 : f32 to vector<32x128xf32>
      %c0_i32_186 = arith.constant 0 : i32
      %c32_i32_187 = arith.constant 32 : i32
      %401 = arith.muli %c0_i32_186, %c32_i32_187 : i32
      %402 = tpu.assume_multiple %401, 32 : i32
      %403 = arith.index_cast %402 : i32 to index
      %c0_188 = arith.constant 0 : index
      %404 = vector.load %arg6[%403, %c0_188] : memref<32x128xf32, #tpu.memory_space<vmem>>, vector<32x128xf32>
      %405 = tpu.bitcast %404 : vector<32x128xf32> -> vector<32x128xi32>
      %406 = vector.broadcast %399 : i32 to vector<32x128xi32>
      %407 = arith.cmpi sge, %405, %406 : vector<32x128xi32>
      %cst_189 = arith.constant 1.000000e+00 : f32
      %cst_190 = arith.constant 0.000000e+00 : f32
      %408 = vector.broadcast %cst_189 : f32 to vector<32x128xf32>
      %409 = vector.broadcast %cst_190 : f32 to vector<32x128xf32>
      %410 = arith.select %407, %408, %409 : vector<32x128xi1>, vector<32x128xf32>
      %411 = arith.addf %400, %410 : vector<32x128xf32>
      %c1_i32_191 = arith.constant 1 : i32
      %412 = vector.shape_cast %411 : vector<32x128xf32> to vector<1x32x128xf32>
      %cst_192 = arith.constant dense<0.000000e+00> : vector<1xf32>
      %413 = vector.multi_reduction <add>, %412, %cst_192 [1, 2] : vector<1x32x128xf32> to vector<1xf32>
      %414 = vector.shape_cast %413 : vector<1xf32> to vector<1x1x1xf32>
      %415 = vector.extract %414[0, 0, 0] : f32 from vector<1x1x1xf32>
      %cst_193 = arith.constant 1.280000e+02 : f32
      %416 = arith.cmpf oge, %415, %cst_193 : f32
      %417 = arith.select %416, %399, %398 : i32
      %c8192_i32 = arith.constant 8192 : i32
      %418 = arith.addi %417, %c8192_i32 : i32
      %cst_194 = arith.constant 0.000000e+00 : f32
      %419 = vector.broadcast %cst_194 : f32 to vector<32x128xf32>
      %c0_i32_195 = arith.constant 0 : i32
      %c32_i32_196 = arith.constant 32 : i32
      %420 = arith.muli %c0_i32_195, %c32_i32_196 : i32
      %421 = tpu.assume_multiple %420, 32 : i32
      %422 = arith.index_cast %421 : i32 to index
      %c0_197 = arith.constant 0 : index
      %423 = vector.load %arg6[%422, %c0_197] : memref<32x128xf32, #tpu.memory_space<vmem>>, vector<32x128xf32>
      %424 = tpu.bitcast %423 : vector<32x128xf32> -> vector<32x128xi32>
      %425 = vector.broadcast %418 : i32 to vector<32x128xi32>
      %426 = arith.cmpi sge, %424, %425 : vector<32x128xi32>
      %cst_198 = arith.constant 1.000000e+00 : f32
      %cst_199 = arith.constant 0.000000e+00 : f32
      %427 = vector.broadcast %cst_198 : f32 to vector<32x128xf32>
      %428 = vector.broadcast %cst_199 : f32 to vector<32x128xf32>
      %429 = arith.select %426, %427, %428 : vector<32x128xi1>, vector<32x128xf32>
      %430 = arith.addf %419, %429 : vector<32x128xf32>
      %c1_i32_200 = arith.constant 1 : i32
      %431 = vector.shape_cast %430 : vector<32x128xf32> to vector<1x32x128xf32>
      %cst_201 = arith.constant dense<0.000000e+00> : vector<1xf32>
      %432 = vector.multi_reduction <add>, %431, %cst_201 [1, 2] : vector<1x32x128xf32> to vector<1xf32>
      %433 = vector.shape_cast %432 : vector<1xf32> to vector<1x1x1xf32>
      %434 = vector.extract %433[0, 0, 0] : f32 from vector<1x1x1xf32>
      %cst_202 = arith.constant 1.280000e+02 : f32
      %435 = arith.cmpf oge, %434, %cst_202 : f32
      %436 = arith.select %435, %418, %417 : i32
      %c4096_i32 = arith.constant 4096 : i32
      %437 = arith.addi %436, %c4096_i32 : i32
      %cst_203 = arith.constant 0.000000e+00 : f32
      %438 = vector.broadcast %cst_203 : f32 to vector<32x128xf32>
      %c0_i32_204 = arith.constant 0 : i32
      %c32_i32_205 = arith.constant 32 : i32
      %439 = arith.muli %c0_i32_204, %c32_i32_205 : i32
      %440 = tpu.assume_multiple %439, 32 : i32
      %441 = arith.index_cast %440 : i32 to index
      %c0_206 = arith.constant 0 : index
      %442 = vector.load %arg6[%441, %c0_206] : memref<32x128xf32, #tpu.memory_space<vmem>>, vector<32x128xf32>
      %443 = tpu.bitcast %442 : vector<32x128xf32> -> vector<32x128xi32>
      %444 = vector.broadcast %437 : i32 to vector<32x128xi32>
      %445 = arith.cmpi sge, %443, %444 : vector<32x128xi32>
      %cst_207 = arith.constant 1.000000e+00 : f32
      %cst_208 = arith.constant 0.000000e+00 : f32
      %446 = vector.broadcast %cst_207 : f32 to vector<32x128xf32>
      %447 = vector.broadcast %cst_208 : f32 to vector<32x128xf32>
      %448 = arith.select %445, %446, %447 : vector<32x128xi1>, vector<32x128xf32>
      %449 = arith.addf %438, %448 : vector<32x128xf32>
      %c1_i32_209 = arith.constant 1 : i32
      %450 = vector.shape_cast %449 : vector<32x128xf32> to vector<1x32x128xf32>
      %cst_210 = arith.constant dense<0.000000e+00> : vector<1xf32>
      %451 = vector.multi_reduction <add>, %450, %cst_210 [1, 2] : vector<1x32x128xf32> to vector<1xf32>
      %452 = vector.shape_cast %451 : vector<1xf32> to vector<1x1x1xf32>
      %453 = vector.extract %452[0, 0, 0] : f32 from vector<1x1x1xf32>
      %cst_211 = arith.constant 1.280000e+02 : f32
      %454 = arith.cmpf oge, %453, %cst_211 : f32
      %455 = arith.select %454, %437, %436 : i32
      %c2048_i32 = arith.constant 2048 : i32
      %456 = arith.addi %455, %c2048_i32 : i32
      %cst_212 = arith.constant 0.000000e+00 : f32
      %457 = vector.broadcast %cst_212 : f32 to vector<32x128xf32>
      %c0_i32_213 = arith.constant 0 : i32
      %c32_i32_214 = arith.constant 32 : i32
      %458 = arith.muli %c0_i32_213, %c32_i32_214 : i32
      %459 = tpu.assume_multiple %458, 32 : i32
      %460 = arith.index_cast %459 : i32 to index
      %c0_215 = arith.constant 0 : index
      %461 = vector.load %arg6[%460, %c0_215] : memref<32x128xf32, #tpu.memory_space<vmem>>, vector<32x128xf32>
      %462 = tpu.bitcast %461 : vector<32x128xf32> -> vector<32x128xi32>
      %463 = vector.broadcast %456 : i32 to vector<32x128xi32>
      %464 = arith.cmpi sge, %462, %463 : vector<32x128xi32>
      %cst_216 = arith.constant 1.000000e+00 : f32
      %cst_217 = arith.constant 0.000000e+00 : f32
      %465 = vector.broadcast %cst_216 : f32 to vector<32x128xf32>
      %466 = vector.broadcast %cst_217 : f32 to vector<32x128xf32>
      %467 = arith.select %464, %465, %466 : vector<32x128xi1>, vector<32x128xf32>
      %468 = arith.addf %457, %467 : vector<32x128xf32>
      %c1_i32_218 = arith.constant 1 : i32
      %469 = vector.shape_cast %468 : vector<32x128xf32> to vector<1x32x128xf32>
      %cst_219 = arith.constant dense<0.000000e+00> : vector<1xf32>
      %470 = vector.multi_reduction <add>, %469, %cst_219 [1, 2] : vector<1x32x128xf32> to vector<1xf32>
      %471 = vector.shape_cast %470 : vector<1xf32> to vector<1x1x1xf32>
      %472 = vector.extract %471[0, 0, 0] : f32 from vector<1x1x1xf32>
      %cst_220 = arith.constant 1.280000e+02 : f32
      %473 = arith.cmpf oge, %472, %cst_220 : f32
      %474 = arith.select %473, %456, %455 : i32
      %c1024_i32 = arith.constant 1024 : i32
      %475 = arith.addi %474, %c1024_i32 : i32
      %cst_221 = arith.constant 0.000000e+00 : f32
      %476 = vector.broadcast %cst_221 : f32 to vector<32x128xf32>
      %c0_i32_222 = arith.constant 0 : i32
      %c32_i32_223 = arith.constant 32 : i32
      %477 = arith.muli %c0_i32_222, %c32_i32_223 : i32
      %478 = tpu.assume_multiple %477, 32 : i32
      %479 = arith.index_cast %478 : i32 to index
      %c0_224 = arith.constant 0 : index
      %480 = vector.load %arg6[%479, %c0_224] : memref<32x128xf32, #tpu.memory_space<vmem>>, vector<32x128xf32>
      %481 = tpu.bitcast %480 : vector<32x128xf32> -> vector<32x128xi32>
      %482 = vector.broadcast %475 : i32 to vector<32x128xi32>
      %483 = arith.cmpi sge, %481, %482 : vector<32x128xi32>
      %cst_225 = arith.constant 1.000000e+00 : f32
      %cst_226 = arith.constant 0.000000e+00 : f32
      %484 = vector.broadcast %cst_225 : f32 to vector<32x128xf32>
      %485 = vector.broadcast %cst_226 : f32 to vector<32x128xf32>
      %486 = arith.select %483, %484, %485 : vector<32x128xi1>, vector<32x128xf32>
      %487 = arith.addf %476, %486 : vector<32x128xf32>
      %c1_i32_227 = arith.constant 1 : i32
      %488 = vector.shape_cast %487 : vector<32x128xf32> to vector<1x32x128xf32>
      %cst_228 = arith.constant dense<0.000000e+00> : vector<1xf32>
      %489 = vector.multi_reduction <add>, %488, %cst_228 [1, 2] : vector<1x32x128xf32> to vector<1xf32>
      %490 = vector.shape_cast %489 : vector<1xf32> to vector<1x1x1xf32>
      %491 = vector.extract %490[0, 0, 0] : f32 from vector<1x1x1xf32>
      %cst_229 = arith.constant 1.280000e+02 : f32
      %492 = arith.cmpf oge, %491, %cst_229 : f32
      %493 = arith.select %492, %475, %474 : i32
      %c512_i32 = arith.constant 512 : i32
      %494 = arith.addi %493, %c512_i32 : i32
      %cst_230 = arith.constant 0.000000e+00 : f32
      %495 = vector.broadcast %cst_230 : f32 to vector<32x128xf32>
      %c0_i32_231 = arith.constant 0 : i32
      %c32_i32_232 = arith.constant 32 : i32
      %496 = arith.muli %c0_i32_231, %c32_i32_232 : i32
      %497 = tpu.assume_multiple %496, 32 : i32
      %498 = arith.index_cast %497 : i32 to index
      %c0_233 = arith.constant 0 : index
      %499 = vector.load %arg6[%498, %c0_233] : memref<32x128xf32, #tpu.memory_space<vmem>>, vector<32x128xf32>
      %500 = tpu.bitcast %499 : vector<32x128xf32> -> vector<32x128xi32>
      %501 = vector.broadcast %494 : i32 to vector<32x128xi32>
      %502 = arith.cmpi sge, %500, %501 : vector<32x128xi32>
      %cst_234 = arith.constant 1.000000e+00 : f32
      %cst_235 = arith.constant 0.000000e+00 : f32
      %503 = vector.broadcast %cst_234 : f32 to vector<32x128xf32>
      %504 = vector.broadcast %cst_235 : f32 to vector<32x128xf32>
      %505 = arith.select %502, %503, %504 : vector<32x128xi1>, vector<32x128xf32>
      %506 = arith.addf %495, %505 : vector<32x128xf32>
      %c1_i32_236 = arith.constant 1 : i32
      %507 = vector.shape_cast %506 : vector<32x128xf32> to vector<1x32x128xf32>
      %cst_237 = arith.constant dense<0.000000e+00> : vector<1xf32>
      %508 = vector.multi_reduction <add>, %507, %cst_237 [1, 2] : vector<1x32x128xf32> to vector<1xf32>
      %509 = vector.shape_cast %508 : vector<1xf32> to vector<1x1x1xf32>
      %510 = vector.extract %509[0, 0, 0] : f32 from vector<1x1x1xf32>
      %cst_238 = arith.constant 1.280000e+02 : f32
      %511 = arith.cmpf oge, %510, %cst_238 : f32
      %512 = arith.select %511, %494, %493 : i32
      %c256_i32 = arith.constant 256 : i32
      %513 = arith.addi %512, %c256_i32 : i32
      %cst_239 = arith.constant 0.000000e+00 : f32
      %514 = vector.broadcast %cst_239 : f32 to vector<32x128xf32>
      %c0_i32_240 = arith.constant 0 : i32
      %c32_i32_241 = arith.constant 32 : i32
      %515 = arith.muli %c0_i32_240, %c32_i32_241 : i32
      %516 = tpu.assume_multiple %515, 32 : i32
      %517 = arith.index_cast %516 : i32 to index
      %c0_242 = arith.constant 0 : index
      %518 = vector.load %arg6[%517, %c0_242] : memref<32x128xf32, #tpu.memory_space<vmem>>, vector<32x128xf32>
      %519 = tpu.bitcast %518 : vector<32x128xf32> -> vector<32x128xi32>
      %520 = vector.broadcast %513 : i32 to vector<32x128xi32>
      %521 = arith.cmpi sge, %519, %520 : vector<32x128xi32>
      %cst_243 = arith.constant 1.000000e+00 : f32
      %cst_244 = arith.constant 0.000000e+00 : f32
      %522 = vector.broadcast %cst_243 : f32 to vector<32x128xf32>
      %523 = vector.broadcast %cst_244 : f32 to vector<32x128xf32>
      %524 = arith.select %521, %522, %523 : vector<32x128xi1>, vector<32x128xf32>
      %525 = arith.addf %514, %524 : vector<32x128xf32>
      %c1_i32_245 = arith.constant 1 : i32
      %526 = vector.shape_cast %525 : vector<32x128xf32> to vector<1x32x128xf32>
      %cst_246 = arith.constant dense<0.000000e+00> : vector<1xf32>
      %527 = vector.multi_reduction <add>, %526, %cst_246 [1, 2] : vector<1x32x128xf32> to vector<1xf32>
      %528 = vector.shape_cast %527 : vector<1xf32> to vector<1x1x1xf32>
      %529 = vector.extract %528[0, 0, 0] : f32 from vector<1x1x1xf32>
      %cst_247 = arith.constant 1.280000e+02 : f32
      %530 = arith.cmpf oge, %529, %cst_247 : f32
      %531 = arith.select %530, %513, %512 : i32
      %c128_i32 = arith.constant 128 : i32
      %532 = arith.addi %531, %c128_i32 : i32
      %cst_248 = arith.constant 0.000000e+00 : f32
      %533 = vector.broadcast %cst_248 : f32 to vector<32x128xf32>
      %c0_i32_249 = arith.constant 0 : i32
      %c32_i32_250 = arith.constant 32 : i32
      %534 = arith.muli %c0_i32_249, %c32_i32_250 : i32
      %535 = tpu.assume_multiple %534, 32 : i32
      %536 = arith.index_cast %535 : i32 to index
      %c0_251 = arith.constant 0 : index
      %537 = vector.load %arg6[%536, %c0_251] : memref<32x128xf32, #tpu.memory_space<vmem>>, vector<32x128xf32>
      %538 = tpu.bitcast %537 : vector<32x128xf32> -> vector<32x128xi32>
      %539 = vector.broadcast %532 : i32 to vector<32x128xi32>
      %540 = arith.cmpi sge, %538, %539 : vector<32x128xi32>
      %cst_252 = arith.constant 1.000000e+00 : f32
      %cst_253 = arith.constant 0.000000e+00 : f32
      %541 = vector.broadcast %cst_252 : f32 to vector<32x128xf32>
      %542 = vector.broadcast %cst_253 : f32 to vector<32x128xf32>
      %543 = arith.select %540, %541, %542 : vector<32x128xi1>, vector<32x128xf32>
      %544 = arith.addf %533, %543 : vector<32x128xf32>
      %c1_i32_254 = arith.constant 1 : i32
      %545 = vector.shape_cast %544 : vector<32x128xf32> to vector<1x32x128xf32>
      %cst_255 = arith.constant dense<0.000000e+00> : vector<1xf32>
      %546 = vector.multi_reduction <add>, %545, %cst_255 [1, 2] : vector<1x32x128xf32> to vector<1xf32>
      %547 = vector.shape_cast %546 : vector<1xf32> to vector<1x1x1xf32>
      %548 = vector.extract %547[0, 0, 0] : f32 from vector<1x1x1xf32>
      %cst_256 = arith.constant 1.280000e+02 : f32
      %549 = arith.cmpf oge, %548, %cst_256 : f32
      %550 = arith.select %549, %532, %531 : i32
      %c64_i32 = arith.constant 64 : i32
      %551 = arith.addi %550, %c64_i32 : i32
      %cst_257 = arith.constant 0.000000e+00 : f32
      %552 = vector.broadcast %cst_257 : f32 to vector<32x128xf32>
      %c0_i32_258 = arith.constant 0 : i32
      %c32_i32_259 = arith.constant 32 : i32
      %553 = arith.muli %c0_i32_258, %c32_i32_259 : i32
      %554 = tpu.assume_multiple %553, 32 : i32
      %555 = arith.index_cast %554 : i32 to index
      %c0_260 = arith.constant 0 : index
      %556 = vector.load %arg6[%555, %c0_260] : memref<32x128xf32, #tpu.memory_space<vmem>>, vector<32x128xf32>
      %557 = tpu.bitcast %556 : vector<32x128xf32> -> vector<32x128xi32>
      %558 = vector.broadcast %551 : i32 to vector<32x128xi32>
      %559 = arith.cmpi sge, %557, %558 : vector<32x128xi32>
      %cst_261 = arith.constant 1.000000e+00 : f32
      %cst_262 = arith.constant 0.000000e+00 : f32
      %560 = vector.broadcast %cst_261 : f32 to vector<32x128xf32>
      %561 = vector.broadcast %cst_262 : f32 to vector<32x128xf32>
      %562 = arith.select %559, %560, %561 : vector<32x128xi1>, vector<32x128xf32>
      %563 = arith.addf %552, %562 : vector<32x128xf32>
      %c1_i32_263 = arith.constant 1 : i32
      %564 = vector.shape_cast %563 : vector<32x128xf32> to vector<1x32x128xf32>
      %cst_264 = arith.constant dense<0.000000e+00> : vector<1xf32>
      %565 = vector.multi_reduction <add>, %564, %cst_264 [1, 2] : vector<1x32x128xf32> to vector<1xf32>
      %566 = vector.shape_cast %565 : vector<1xf32> to vector<1x1x1xf32>
      %567 = vector.extract %566[0, 0, 0] : f32 from vector<1x1x1xf32>
      %cst_265 = arith.constant 1.280000e+02 : f32
      %568 = arith.cmpf oge, %567, %cst_265 : f32
      %569 = arith.select %568, %551, %550 : i32
      %c32_i32_266 = arith.constant 32 : i32
      %570 = arith.addi %569, %c32_i32_266 : i32
      %cst_267 = arith.constant 0.000000e+00 : f32
      %571 = vector.broadcast %cst_267 : f32 to vector<32x128xf32>
      %c0_i32_268 = arith.constant 0 : i32
      %c32_i32_269 = arith.constant 32 : i32
      %572 = arith.muli %c0_i32_268, %c32_i32_269 : i32
      %573 = tpu.assume_multiple %572, 32 : i32
      %574 = arith.index_cast %573 : i32 to index
      %c0_270 = arith.constant 0 : index
      %575 = vector.load %arg6[%574, %c0_270] : memref<32x128xf32, #tpu.memory_space<vmem>>, vector<32x128xf32>
      %576 = tpu.bitcast %575 : vector<32x128xf32> -> vector<32x128xi32>
      %577 = vector.broadcast %570 : i32 to vector<32x128xi32>
      %578 = arith.cmpi sge, %576, %577 : vector<32x128xi32>
      %cst_271 = arith.constant 1.000000e+00 : f32
      %cst_272 = arith.constant 0.000000e+00 : f32
      %579 = vector.broadcast %cst_271 : f32 to vector<32x128xf32>
      %580 = vector.broadcast %cst_272 : f32 to vector<32x128xf32>
      %581 = arith.select %578, %579, %580 : vector<32x128xi1>, vector<32x128xf32>
      %582 = arith.addf %571, %581 : vector<32x128xf32>
      %c1_i32_273 = arith.constant 1 : i32
      %583 = vector.shape_cast %582 : vector<32x128xf32> to vector<1x32x128xf32>
      %cst_274 = arith.constant dense<0.000000e+00> : vector<1xf32>
      %584 = vector.multi_reduction <add>, %583, %cst_274 [1, 2] : vector<1x32x128xf32> to vector<1xf32>
      %585 = vector.shape_cast %584 : vector<1xf32> to vector<1x1x1xf32>
      %586 = vector.extract %585[0, 0, 0] : f32 from vector<1x1x1xf32>
      %cst_275 = arith.constant 1.280000e+02 : f32
      %587 = arith.cmpf oge, %586, %cst_275 : f32
      %588 = arith.select %587, %570, %569 : i32
      %c16_i32 = arith.constant 16 : i32
      %589 = arith.addi %588, %c16_i32 : i32
      %cst_276 = arith.constant 0.000000e+00 : f32
      %590 = vector.broadcast %cst_276 : f32 to vector<32x128xf32>
      %c0_i32_277 = arith.constant 0 : i32
      %c32_i32_278 = arith.constant 32 : i32
      %591 = arith.muli %c0_i32_277, %c32_i32_278 : i32
      %592 = tpu.assume_multiple %591, 32 : i32
      %593 = arith.index_cast %592 : i32 to index
      %c0_279 = arith.constant 0 : index
      %594 = vector.load %arg6[%593, %c0_279] : memref<32x128xf32, #tpu.memory_space<vmem>>, vector<32x128xf32>
      %595 = tpu.bitcast %594 : vector<32x128xf32> -> vector<32x128xi32>
      %596 = vector.broadcast %589 : i32 to vector<32x128xi32>
      %597 = arith.cmpi sge, %595, %596 : vector<32x128xi32>
      %cst_280 = arith.constant 1.000000e+00 : f32
      %cst_281 = arith.constant 0.000000e+00 : f32
      %598 = vector.broadcast %cst_280 : f32 to vector<32x128xf32>
      %599 = vector.broadcast %cst_281 : f32 to vector<32x128xf32>
      %600 = arith.select %597, %598, %599 : vector<32x128xi1>, vector<32x128xf32>
      %601 = arith.addf %590, %600 : vector<32x128xf32>
      %c1_i32_282 = arith.constant 1 : i32
      %602 = vector.shape_cast %601 : vector<32x128xf32> to vector<1x32x128xf32>
      %cst_283 = arith.constant dense<0.000000e+00> : vector<1xf32>
      %603 = vector.multi_reduction <add>, %602, %cst_283 [1, 2] : vector<1x32x128xf32> to vector<1xf32>
      %604 = vector.shape_cast %603 : vector<1xf32> to vector<1x1x1xf32>
      %605 = vector.extract %604[0, 0, 0] : f32 from vector<1x1x1xf32>
      %cst_284 = arith.constant 1.280000e+02 : f32
      %606 = arith.cmpf oge, %605, %cst_284 : f32
      %607 = arith.select %606, %589, %588 : i32
      %c8_i32_285 = arith.constant 8 : i32
      %608 = arith.addi %607, %c8_i32_285 : i32
      %cst_286 = arith.constant 0.000000e+00 : f32
      %609 = vector.broadcast %cst_286 : f32 to vector<32x128xf32>
      %c0_i32_287 = arith.constant 0 : i32
      %c32_i32_288 = arith.constant 32 : i32
      %610 = arith.muli %c0_i32_287, %c32_i32_288 : i32
      %611 = tpu.assume_multiple %610, 32 : i32
      %612 = arith.index_cast %611 : i32 to index
      %c0_289 = arith.constant 0 : index
      %613 = vector.load %arg6[%612, %c0_289] : memref<32x128xf32, #tpu.memory_space<vmem>>, vector<32x128xf32>
      %614 = tpu.bitcast %613 : vector<32x128xf32> -> vector<32x128xi32>
      %615 = vector.broadcast %608 : i32 to vector<32x128xi32>
      %616 = arith.cmpi sge, %614, %615 : vector<32x128xi32>
      %cst_290 = arith.constant 1.000000e+00 : f32
      %cst_291 = arith.constant 0.000000e+00 : f32
      %617 = vector.broadcast %cst_290 : f32 to vector<32x128xf32>
      %618 = vector.broadcast %cst_291 : f32 to vector<32x128xf32>
      %619 = arith.select %616, %617, %618 : vector<32x128xi1>, vector<32x128xf32>
      %620 = arith.addf %609, %619 : vector<32x128xf32>
      %c1_i32_292 = arith.constant 1 : i32
      %621 = vector.shape_cast %620 : vector<32x128xf32> to vector<1x32x128xf32>
      %cst_293 = arith.constant dense<0.000000e+00> : vector<1xf32>
      %622 = vector.multi_reduction <add>, %621, %cst_293 [1, 2] : vector<1x32x128xf32> to vector<1xf32>
      %623 = vector.shape_cast %622 : vector<1xf32> to vector<1x1x1xf32>
      %624 = vector.extract %623[0, 0, 0] : f32 from vector<1x1x1xf32>
      %cst_294 = arith.constant 1.280000e+02 : f32
      %625 = arith.cmpf oge, %624, %cst_294 : f32
      %626 = arith.select %625, %608, %607 : i32
      %c4_i32_295 = arith.constant 4 : i32
      %627 = arith.addi %626, %c4_i32_295 : i32
      %cst_296 = arith.constant 0.000000e+00 : f32
      %628 = vector.broadcast %cst_296 : f32 to vector<32x128xf32>
      %c0_i32_297 = arith.constant 0 : i32
      %c32_i32_298 = arith.constant 32 : i32
      %629 = arith.muli %c0_i32_297, %c32_i32_298 : i32
      %630 = tpu.assume_multiple %629, 32 : i32
      %631 = arith.index_cast %630 : i32 to index
      %c0_299 = arith.constant 0 : index
      %632 = vector.load %arg6[%631, %c0_299] : memref<32x128xf32, #tpu.memory_space<vmem>>, vector<32x128xf32>
      %633 = tpu.bitcast %632 : vector<32x128xf32> -> vector<32x128xi32>
      %634 = vector.broadcast %627 : i32 to vector<32x128xi32>
      %635 = arith.cmpi sge, %633, %634 : vector<32x128xi32>
      %cst_300 = arith.constant 1.000000e+00 : f32
      %cst_301 = arith.constant 0.000000e+00 : f32
      %636 = vector.broadcast %cst_300 : f32 to vector<32x128xf32>
      %637 = vector.broadcast %cst_301 : f32 to vector<32x128xf32>
      %638 = arith.select %635, %636, %637 : vector<32x128xi1>, vector<32x128xf32>
      %639 = arith.addf %628, %638 : vector<32x128xf32>
      %c1_i32_302 = arith.constant 1 : i32
      %640 = vector.shape_cast %639 : vector<32x128xf32> to vector<1x32x128xf32>
      %cst_303 = arith.constant dense<0.000000e+00> : vector<1xf32>
      %641 = vector.multi_reduction <add>, %640, %cst_303 [1, 2] : vector<1x32x128xf32> to vector<1xf32>
      %642 = vector.shape_cast %641 : vector<1xf32> to vector<1x1x1xf32>
      %643 = vector.extract %642[0, 0, 0] : f32 from vector<1x1x1xf32>
      %cst_304 = arith.constant 1.280000e+02 : f32
      %644 = arith.cmpf oge, %643, %cst_304 : f32
      %645 = arith.select %644, %627, %626 : i32
      %c2_i32_305 = arith.constant 2 : i32
      %646 = arith.addi %645, %c2_i32_305 : i32
      %cst_306 = arith.constant 0.000000e+00 : f32
      %647 = vector.broadcast %cst_306 : f32 to vector<32x128xf32>
      %c0_i32_307 = arith.constant 0 : i32
      %c32_i32_308 = arith.constant 32 : i32
      %648 = arith.muli %c0_i32_307, %c32_i32_308 : i32
      %649 = tpu.assume_multiple %648, 32 : i32
      %650 = arith.index_cast %649 : i32 to index
      %c0_309 = arith.constant 0 : index
      %651 = vector.load %arg6[%650, %c0_309] : memref<32x128xf32, #tpu.memory_space<vmem>>, vector<32x128xf32>
      %652 = tpu.bitcast %651 : vector<32x128xf32> -> vector<32x128xi32>
      %653 = vector.broadcast %646 : i32 to vector<32x128xi32>
      %654 = arith.cmpi sge, %652, %653 : vector<32x128xi32>
      %cst_310 = arith.constant 1.000000e+00 : f32
      %cst_311 = arith.constant 0.000000e+00 : f32
      %655 = vector.broadcast %cst_310 : f32 to vector<32x128xf32>
      %656 = vector.broadcast %cst_311 : f32 to vector<32x128xf32>
      %657 = arith.select %654, %655, %656 : vector<32x128xi1>, vector<32x128xf32>
      %658 = arith.addf %647, %657 : vector<32x128xf32>
      %c1_i32_312 = arith.constant 1 : i32
      %659 = vector.shape_cast %658 : vector<32x128xf32> to vector<1x32x128xf32>
      %cst_313 = arith.constant dense<0.000000e+00> : vector<1xf32>
      %660 = vector.multi_reduction <add>, %659, %cst_313 [1, 2] : vector<1x32x128xf32> to vector<1xf32>
      %661 = vector.shape_cast %660 : vector<1xf32> to vector<1x1x1xf32>
      %662 = vector.extract %661[0, 0, 0] : f32 from vector<1x1x1xf32>
      %cst_314 = arith.constant 1.280000e+02 : f32
      %663 = arith.cmpf oge, %662, %cst_314 : f32
      %664 = arith.select %663, %646, %645 : i32
      %c1_i32_315 = arith.constant 1 : i32
      %665 = arith.addi %664, %c1_i32_315 : i32
      %cst_316 = arith.constant 0.000000e+00 : f32
      %666 = vector.broadcast %cst_316 : f32 to vector<32x128xf32>
      %c0_i32_317 = arith.constant 0 : i32
      %c32_i32_318 = arith.constant 32 : i32
      %667 = arith.muli %c0_i32_317, %c32_i32_318 : i32
      %668 = tpu.assume_multiple %667, 32 : i32
      %669 = arith.index_cast %668 : i32 to index
      %c0_319 = arith.constant 0 : index
      %670 = vector.load %arg6[%669, %c0_319] : memref<32x128xf32, #tpu.memory_space<vmem>>, vector<32x128xf32>
      %671 = tpu.bitcast %670 : vector<32x128xf32> -> vector<32x128xi32>
      %672 = vector.broadcast %665 : i32 to vector<32x128xi32>
      %673 = arith.cmpi sge, %671, %672 : vector<32x128xi32>
      %cst_320 = arith.constant 1.000000e+00 : f32
      %cst_321 = arith.constant 0.000000e+00 : f32
      %674 = vector.broadcast %cst_320 : f32 to vector<32x128xf32>
      %675 = vector.broadcast %cst_321 : f32 to vector<32x128xf32>
      %676 = arith.select %673, %674, %675 : vector<32x128xi1>, vector<32x128xf32>
      %677 = arith.addf %666, %676 : vector<32x128xf32>
      %c1_i32_322 = arith.constant 1 : i32
      %678 = vector.shape_cast %677 : vector<32x128xf32> to vector<1x32x128xf32>
      %cst_323 = arith.constant dense<0.000000e+00> : vector<1xf32>
      %679 = vector.multi_reduction <add>, %678, %cst_323 [1, 2] : vector<1x32x128xf32> to vector<1xf32>
      %680 = vector.shape_cast %679 : vector<1xf32> to vector<1x1x1xf32>
      %681 = vector.extract %680[0, 0, 0] : f32 from vector<1x1x1xf32>
      %cst_324 = arith.constant 1.280000e+02 : f32
      %682 = arith.cmpf oge, %681, %cst_324 : f32
      %683 = arith.select %682, %665, %664 : i32
      %cst_325 = arith.constant 0.000000e+00 : f32
      %684 = vector.broadcast %cst_325 : f32 to vector<32x128xf32>
      %cst_326 = arith.constant 0.000000e+00 : f32
      %685 = vector.broadcast %cst_326 : f32 to vector<32x128xf32>
      %c0_i32_327 = arith.constant 0 : i32
      %c32_i32_328 = arith.constant 32 : i32
      %686 = arith.muli %c0_i32_327, %c32_i32_328 : i32
      %687 = tpu.assume_multiple %686, 32 : i32
      %688 = arith.index_cast %687 : i32 to index
      %c0_329 = arith.constant 0 : index
      %689 = vector.load %arg6[%688, %c0_329] : memref<32x128xf32, #tpu.memory_space<vmem>>, vector<32x128xf32>
      %690 = tpu.bitcast %689 : vector<32x128xf32> -> vector<32x128xi32>
      %691 = vector.broadcast %683 : i32 to vector<32x128xi32>
      %692 = arith.cmpi sge, %690, %691 : vector<32x128xi32>
      %cst_330 = arith.constant 0.000000e+00 : f32
      %693 = vector.broadcast %cst_330 : f32 to vector<32x128xf32>
      %694 = arith.select %692, %689, %693 : vector<32x128xi1>, vector<32x128xf32>
      %695 = arith.addf %684, %694 : vector<32x128xf32>
      %cst_331 = arith.constant 1.000000e+00 : f32
      %cst_332 = arith.constant 0.000000e+00 : f32
      %696 = vector.broadcast %cst_331 : f32 to vector<32x128xf32>
      %697 = vector.broadcast %cst_332 : f32 to vector<32x128xf32>
      %698 = arith.select %692, %696, %697 : vector<32x128xi1>, vector<32x128xf32>
      %699 = arith.addf %685, %698 : vector<32x128xf32>
      %c1_i32_333 = arith.constant 1 : i32
      %700 = vector.shape_cast %695 : vector<32x128xf32> to vector<1x32x128xf32>
      %cst_334 = arith.constant dense<0.000000e+00> : vector<1xf32>
      %701 = vector.multi_reduction <add>, %700, %cst_334 [1, 2] : vector<1x32x128xf32> to vector<1xf32>
      %702 = vector.shape_cast %701 : vector<1xf32> to vector<1x1x1xf32>
      %703 = vector.extract %702[0, 0, 0] : f32 from vector<1x1x1xf32>
      %704 = vector.shape_cast %699 : vector<32x128xf32> to vector<1x32x128xf32>
      %cst_335 = arith.constant dense<0.000000e+00> : vector<1xf32>
      %705 = vector.multi_reduction <add>, %704, %cst_335 [1, 2] : vector<1x32x128xf32> to vector<1xf32>
      %706 = vector.shape_cast %705 : vector<1xf32> to vector<1x1x1xf32>
      %707 = vector.extract %706[0, 0, 0] : f32 from vector<1x1x1xf32>
      %708 = vector.broadcast %683 : i32 to vector<32x128xi32>
      %709 = tpu.bitcast %708 : vector<32x128xi32> -> vector<32x128xf32>
      %710 = vector.shape_cast %709 : vector<32x128xf32> to vector<1x32x128xf32>
      %cst_336 = arith.constant dense<0xFF800000> : vector<1xf32>
      %711 = vector.multi_reduction <maximumf>, %710, %cst_336 [1, 2] : vector<1x32x128xf32> to vector<1xf32>
      %712 = vector.shape_cast %711 : vector<1xf32> to vector<1x1x1xf32>
      %713 = vector.extract %712[0, 0, 0] : f32 from vector<1x1x1xf32>
      %cst_337 = arith.constant 1.280000e+02 : f32
      %714 = arith.subf %707, %cst_337 : f32
      %715 = arith.mulf %714, %713 : f32
      %716 = arith.subf %703, %715 : f32
      %c0_338 = arith.constant 0 : index
      %c0_339 = arith.constant 0 : index
      %717 = vector.load %arg7[%c0_338, %c0_339] : memref<2x128xf32, #tpu.memory_space<vmem>>, vector<2x128xf32>
      %718 = vector.shape_cast %717 : vector<2x128xf32> to vector<1x2x128xf32>
      %cst_340 = arith.constant dense<0.000000e+00> : vector<1xf32>
      %719 = vector.multi_reduction <add>, %718, %cst_340 [1, 2] : vector<1x2x128xf32> to vector<1xf32>
      %720 = vector.shape_cast %719 : vector<1xf32> to vector<1x1x1xf32>
      %721 = vector.extract %720[0, 0, 0] : f32 from vector<1x1x1xf32>
      %c0_341 = arith.constant 0 : index
      %c0_342 = arith.constant 0 : index
      %722 = vector.load %arg8[%c0_341, %c0_342] : memref<2x128xf32, #tpu.memory_space<vmem>>, vector<2x128xf32>
      %723 = vector.shape_cast %722 : vector<2x128xf32> to vector<1x2x128xf32>
      %cst_343 = arith.constant dense<0.000000e+00> : vector<1xf32>
      %724 = vector.multi_reduction <add>, %723, %cst_343 [1, 2] : vector<1x2x128xf32> to vector<1xf32>
      %725 = vector.shape_cast %724 : vector<1xf32> to vector<1x1x1xf32>
      %726 = vector.extract %725[0, 0, 0] : f32 from vector<1x1x1xf32>
      %727 = tpu.iota {dimensions = array<i32: 0>} : vector<8x128xi32>
      %728 = tpu.iota {dimensions = array<i32: 1>} : vector<8x128xi32>
      %c0_i32_344 = arith.constant 0 : i32
      %729 = vector.broadcast %c0_i32_344 : i32 to vector<8x128xi32>
      %730 = arith.cmpi eq, %727, %729 : vector<8x128xi32>
      %c0_i32_345 = arith.constant 0 : i32
      %731 = vector.broadcast %c0_i32_345 : i32 to vector<8x128xi32>
      %732 = arith.cmpi eq, %728, %731 : vector<8x128xi32>
      %733 = arith.andi %730, %732 : vector<8x128xi1>
      %cst_346 = arith.constant 0.000000e+00 : f32
      %734 = vector.broadcast %721 : f32 to vector<8x128xf32>
      %735 = vector.broadcast %cst_346 : f32 to vector<8x128xf32>
      %736 = arith.select %733, %734, %735 : vector<8x128xi1>, vector<8x128xf32>
      %c0_i32_347 = arith.constant 0 : i32
      %737 = vector.broadcast %c0_i32_347 : i32 to vector<8x128xi32>
      %738 = arith.cmpi eq, %727, %737 : vector<8x128xi32>
      %c1_i32_348 = arith.constant 1 : i32
      %739 = vector.broadcast %c1_i32_348 : i32 to vector<8x128xi32>
      %740 = arith.cmpi eq, %728, %739 : vector<8x128xi32>
      %741 = arith.andi %738, %740 : vector<8x128xi1>
      %742 = vector.broadcast %726 : f32 to vector<8x128xf32>
      %743 = arith.select %741, %742, %736 : vector<8x128xi1>, vector<8x128xf32>
      %c0_i32_349 = arith.constant 0 : i32
      %744 = vector.broadcast %c0_i32_349 : i32 to vector<8x128xi32>
      %745 = arith.cmpi eq, %727, %744 : vector<8x128xi32>
      %c2_i32_350 = arith.constant 2 : i32
      %746 = vector.broadcast %c2_i32_350 : i32 to vector<8x128xi32>
      %747 = arith.cmpi eq, %728, %746 : vector<8x128xi32>
      %748 = arith.andi %745, %747 : vector<8x128xi1>
      %749 = vector.broadcast %716 : f32 to vector<8x128xf32>
      %750 = arith.select %748, %749, %743 : vector<8x128xi1>, vector<8x128xf32>
      %c0_351 = arith.constant 0 : index
      %c0_352 = arith.constant 0 : index
      %c0_353 = arith.constant 0 : index
      %751 = vector.load %arg5[%c0_351, %c0_352, %c0_353] : memref<1x8x128xf32, #tpu.memory_space<vmem>>, vector<1x8x128xf32>
      %752 = vector.shape_cast %751 : vector<1x8x128xf32> to vector<8x128xf32>
      %753 = vector.shape_cast %750 : vector<8x128xf32> to vector<1x8x128xf32>
      tpu.vector_store %arg5[%c0_351, %c0_352, %c0_353], %753 {strides = array<i32>} : memref<1x8x128xf32, #tpu.memory_space<vmem>>, vector<1x8x128xf32>,
    } else {
    }
    return
  }
  func.func @transform_0(%arg0: i32, %arg1: i32) -> (i32, i32, i32) {
    %c0_i32 = arith.constant 0 : i32
    %c0_i32_0 = arith.constant 0 : i32
    return %arg0, %arg1, %c0_i32 : i32, i32, i32
  }
  func.func @transform_1(%arg0: i32, %arg1: i32) -> (i32, i32, i32) {
    %c0_i32 = arith.constant 0 : i32
    %c0_i32_0 = arith.constant 0 : i32
    return %arg0, %arg1, %c0_i32 : i32, i32, i32
  }
  func.func @transform_2(%arg0: i32, %arg1: i32) -> (i32, i32, i32) {
    %c0_i32 = arith.constant 0 : i32
    %c0_i32_0 = arith.constant 0 : i32
    %c0_i32_1 = arith.constant 0 : i32
    return %arg0, %c0_i32, %c0_i32_0 : i32, i32, i32
  }
  func.func @transform_3(%arg0: i32, %arg1: i32) -> (i32, i32, i32) {
    %c0_i32 = arith.constant 0 : i32
    %c0_i32_0 = arith.constant 0 : i32
    %c0_i32_1 = arith.constant 0 : i32
    return %arg0, %c0_i32, %c0_i32_0 : i32, i32, i32
  }
}

</mosaic_0001>

<llo_original>
// kernel: tpu_custom_call.1
$region0: #{tpu_custom_call.1}
  #allocation0 [shape = 'u32[]', space=smem, size = 0x4, offset = 0x4, fixed_abs, tag = 'smem constant byte address 0x4 - core index']
  #allocation1 [shape = 'u32[144,128]{1,0:T(1,128)}', space=vmem, size = 0x12000, scoped, tag = 'internal scratch']
  #allocation2 [shape = 'f32[32,128]{1,0:T(8,128)}', space=vmem, size = 0x4000, scoped, tag = 'scratch operand']
  #allocation3 [shape = 'f32[2,128]{1,0:T(2,128)}', space=vmem, size = 0x400, scoped, tag = 'scratch operand']
  #allocation4 [shape = 'f32[2,128]{1,0:T(2,128)}', space=vmem, size = 0x400, scoped, tag = 'scratch operand']
  %s0 = inlined_call_operand.hbm [shape: f32[2,8,128], index: 0, kind: input, shape index: {}]
  %s1 = inlined_call_operand.hbm [shape: f32[2,8,128], index: 1, kind: input, shape index: {}]
  %s2 = inlined_call_operand.vmem [shape: f32[2,2,128], index: 2, kind: input, shape index: {}]
  %s3 = inlined_call_operand.hbm [shape: f32[2,8,128], index: 3, kind: output, shape index: {}]
  %s4 = sld [smem:[#allocation0]]
  $region61: #{tpu_custom_call.1} parent=0
    _
  %s6 = ssub.s32 1, %s4
  %s7 = scalar_select 0, %s6, %s4
  $region1: #{tpu_custom_call.1} parent=0
    #allocation5 [shape = 'u8[8192]{0}', space=vmem, size = 0x2000, scoped, tag = 'input window, operand 0']
    #allocation6 [shape = 's32[2]{0}', space=sflag, size = 0x8, scoped, tag = 'scoped memory for tpu_custom_call.1']
    #allocation7 [shape = 's32[2]{0}', space=sflag, size = 0x8, scoped, tag = 'scoped memory for tpu_custom_call.1']
    #allocation8 [shape = 'u8[8192]{0}', space=vmem, size = 0x2000, scoped, tag = 'input window, operand 1']
    #allocation9 [shape = 's32[2]{0}', space=sflag, size = 0x8, scoped, tag = 'scoped memory for tpu_custom_call.1']
    #allocation10 [shape = 'u8[8192]{0}', space=vmem, size = 0x2000, scoped, tag = 'output window, operand 0']
    %8 = vsyncpa [#allocation6], 0
    %s9 = scalar_lea.sflag [#allocation6], 1
    %10 = vsyncpa %s9, 0
    %11 = vsyncpa [#allocation9], 0
    %s12 = scalar_lea.sflag [#allocation9], 1
    %13 = vsyncpa %s12, 0
    %14 = vsyncpa [#allocation7], 0
    %s15 = scalar_lea.sflag [#allocation7], 1
    %16 = vsyncpa %s15, 0
    loop: start=0, step=1, limit=4
    $region2: #{tpu_custom_call.1} parent=1 // loop_pre_header
      _
    $region3: #{tpu_custom_call.1} parent=1 // loop_header
      %s18 = sphi 0, %s22
      %p19 = scmp.ge.s32.totalorder %s18, 4
      %s25 = sphi 0, %s37
      %s26 = sphi 0, %s33
      %s27 = sphi 0, %s25
      %s28 = sphi 0, %s26
      %s29 = sphi 0, %s27
      %s30 = sphi 0, %s28
      %s42 = sphi 0, %s44
      %s45 = sphi 0, %s42
      %s46 = sphi 0, %s45
      %s62 = sphi 0, %s46
      %s70 = sphi 0, %s72
      %s73 = sphi 0, %s70
      %s74 = sphi 0, %s73
      %s90 = sphi 0, %s74
      %s96 = sphi 0, %s98
      %s99 = sphi 0, %s96
      %s100 = sphi 0, %s99
      %s116 = sphi 0, %s100
      %s122 = sphi 0, %s124
      %s125 = sphi 0, %s122
      %s126 = sphi 0, %s125
      %s142 = sphi 0, %s126
    $region4: #{tpu_custom_call.1} parent=1 // loop_header_branch
      %21 = sbr.rel (%p19) target = $region8
    $region5: #{tpu_custom_call.1} parent=1 // loop_body
      %s23 = ssub.s32 %s18, 1
      %s24 = ssub.s32 %s18, 2
      %s31 = sadd.s32 1, %s26
      %p32 = scmp.ge.s32.totalorder %s31, 1
      %s33 = scalar_select %p32, 0, %s31
      %s34 = sadd.s32 1, %s25
      %s35 = scalar_select %p32, %s34, %s25
      %p36 = scmp.ge.s32.totalorder %s35, 2
      %s37 = scalar_select %p36, 0, %s35
      %s38 = ssub.s32 %s25, %s37
      %s39 = ssub.s32 %s26, %s33
      %s40 = sor.u32 %s38, %s39
      %p41 = scmp.eq.s32.totalorder %s40, 0
      %s43 = sadd.s32 %s42, 1
      %s44 = scalar_select %p41, %s42, %s43
      %p47 = pneg %p41
      %p48 = scmp.eq.s32.totalorder %s18, 1
      %p49 = por %p47, %p48
      %p50 = scmp.ne.s32.totalorder %s42, %s45
      %p51 = scmp.eq.s32.totalorder %s18, 0
      %p52 = por %p50, %p51
      %p53 = scmp.ne.s32.totalorder %s42, %s45
      %p54 = scmp.eq.s32.totalorder %s23, 1
      %p55 = por %p53, %p54
      %p56 = scmp.ne.s32.totalorder %s45, %s46
      %p57 = scmp.eq.s32.totalorder %s23, 0
      %p58 = por %p56, %p57
      %p59 = scmp.ne.s32.totalorder %s45, %s46
      %p60 = scmp.eq.s32.totalorder %s24, 1
      %p61 = por %p59, %p60
      %p63 = scmp.ne.s32.totalorder %s46, %s62
      %p64 = scmp.eq.s32.totalorder %s24, 0
      %p65 = por %p63, %p64
      %s66 = ssub.s32 %s25, %s37
      %s67 = ssub.s32 %s26, %s33
      %s68 = sor.u32 %s66, %s67
      %p69 = scmp.eq.s32.totalorder %s68, 0
      %s71 = sadd.s32 %s70, 1
      %s72 = scalar_select %p69, %s70, %s71
      %p75 = pneg %p69
      %p76 = scmp.eq.s32.totalorder %s18, 1
      %p77 = por %p75, %p76
      %p78 = scmp.ne.s32.totalorder %s70, %s73
      %p79 = scmp.eq.s32.totalorder %s18, 0
      %p80 = por %p78, %p79
      %p81 = scmp.ne.s32.totalorder %s70, %s73
      %p82 = scmp.eq.s32.totalorder %s23, 1
      %p83 = por %p81, %p82
      %p84 = scmp.ne.s32.totalorder %s73, %s74
      %p85 = scmp.eq.s32.totalorder %s23, 0
      %p86 = por %p84, %p85
      %p87 = scmp.ne.s32.totalorder %s73, %s74
      %p88 = scmp.eq.s32.totalorder %s24, 1
      %p89 = por %p87, %p88
      %p91 = scmp.ne.s32.totalorder %s74, %s90
      %p92 = scmp.eq.s32.totalorder %s24, 0
      %p93 = por %p91, %p92
      %s94 = ssub.s32 %s25, %s37
      %p95 = scmp.eq.s32.totalorder %s94, 0
      %s97 = sadd.s32 %s96, 1
      %s98 = scalar_select %p95, %s96, %s97
      %p101 = pneg %p95
      %p102 = scmp.eq.s32.totalorder %s18, 1
      %p103 = por %p101, %p102
      %p104 = scmp.ne.s32.totalorder %s96, %s99
      %p105 = scmp.eq.s32.totalorder %s18, 0
      %p106 = por %p104, %p105
      %p107 = scmp.ne.s32.totalorder %s96, %s99
      %p108 = scmp.eq.s32.totalorder %s23, 1
      %p109 = por %p107, %p108
      %p110 = scmp.ne.s32.totalorder %s99, %s100
      %p111 = scmp.eq.s32.totalorder %s23, 0
      %p112 = por %p110, %p111
      %p113 = scmp.ne.s32.totalorder %s99, %s100
      %p114 = scmp.eq.s32.totalorder %s24, 1
      %p115 = por %p113, %p114
      %p117 = scmp.ne.s32.totalorder %s100, %s116
      %p118 = scmp.eq.s32.totalorder %s24, 0
      %p119 = por %p117, %p118
      %s120 = ssub.s32 %s25, %s37
      %p121 = scmp.eq.s32.totalorder %s120, 0
      %s123 = sadd.s32 %s122, 1
      %s124 = scalar_select %p121, %s122, %s123
      %p127 = pneg %p121
      %p128 = scmp.eq.s32.totalorder %s18, 1
      %p129 = por %p127, %p128
      %p130 = scmp.ne.s32.totalorder %s122, %s125
      %p131 = scmp.eq.s32.totalorder %s18, 0
      %p132 = por %p130, %p131
      %p133 = scmp.ne.s32.totalorder %s122, %s125
      %p134 = scmp.eq.s32.totalorder %s23, 1
      %p135 = por %p133, %p134
      %p136 = scmp.ne.s32.totalorder %s125, %s126
      %p137 = scmp.eq.s32.totalorder %s23, 0
      %p138 = por %p136, %p137
      %p139 = scmp.ne.s32.totalorder %s125, %s126
      %p140 = scmp.eq.s32.totalorder %s24, 1
      %p141 = por %p139, %p140
      %p143 = scmp.ne.s32.totalorder %s126, %s142
      %p144 = scmp.eq.s32.totalorder %s24, 0
      %p145 = por %p143, %p144
      %p146 = scmp.le.s32.totalorder 1, %s18
      %p147 = scmp.lt.s32.totalorder %s18, 3
      %p148 = pnand %p146, %p147
      %p149 = pneg %p148
      // Predicated region
      $region9: #{tpu_custom_call.1} parent=5 // pred_check
        _
      $region10: #{tpu_custom_call.1} parent=5 // pred_check_branch
        %151 = sbr.rel (%p148) target = $region12
      $region11: #{tpu_custom_call.1} parent=5 // pred_region
        %s152 = ssub.s32 %s18, 1
      $region12: #{tpu_custom_call.1} parent=5 // pred_fallthru
        _
      %p153 = scmp.lt.s32.totalorder %s18, 2
      // Predicated region
      $region13: #{tpu_custom_call.1} parent=5 // pred_check
        %p154 = pneg %p153
      $region14: #{tpu_custom_call.1} parent=5 // pred_check_branch
        %156 = sbr.rel (%p154) target = $region16
      $region15: #{tpu_custom_call.1} parent=5 // pred_region
        // Predicated region
        $region17: #{tpu_custom_call.1} parent=15 // pred_check
          %p157 = pneg %p52
        $region18: #{tpu_custom_call.1} parent=15 // pred_check_branch
          %159 = sbr.rel (%p157) target = $region20
        $region19: #{tpu_custom_call.1} parent=15 // pred_region
          %s160 = sand.u32 %s42, 1
          %s161 = scalar_lea.sflag [#allocation6], %s160
          %s162 = sand.u32 %s42, 1
          %s163 = smul.addr %s162, 8
          %s164 = scalar_lea.vmem [#allocation5], %s163
          %s166 = ssub.s32 128, 128
          %167 = vsyncadd %s161, %s166
          %s168 = sadd.s32 %s26, %s25
          %s169 = smul.addr %s168, 128
          %s170 = scalar_lea.hbm %s0, %s169
          %s172 = sshll.u32 %s164, 4
          %s173 = int_to_ptr.vmem [resolvable:$true] %s172
          %175 = dma.hbm_to_vmem [thread:$0]  %s170, 128, %s173, %s161
        $region20: #{tpu_custom_call.1} parent=15 // pred_fallthru
          _
        // Predicated region
        $region21: #{tpu_custom_call.1} parent=15 // pred_check
          %p176 = pneg %p80
        $region22: #{tpu_custom_call.1} parent=15 // pred_check_branch
          %178 = sbr.rel (%p176) target = $region24
        $region23: #{tpu_custom_call.1} parent=15 // pred_region
          %s179 = sand.u32 %s70, 1
          %s180 = scalar_lea.sflag [#allocation9], %s179
          %s181 = sand.u32 %s70, 1
          %s182 = smul.addr %s181, 8
          %s183 = scalar_lea.vmem [#allocation8], %s182
          %s185 = ssub.s32 128, 128
          %186 = vsyncadd %s180, %s185
          %s187 = sadd.s32 %s26, %s25
          %s188 = smul.addr %s187, 128
          %s189 = scalar_lea.hbm %s1, %s188
          %s191 = sshll.u32 %s183, 4
          %s192 = int_to_ptr.vmem [resolvable:$true] %s191
          %194 = dma.hbm_to_vmem [thread:$0]  %s189, 128, %s192, %s180
        $region24: #{tpu_custom_call.1} parent=15 // pred_fallthru
          _
        // Predicated region
        $region25: #{tpu_custom_call.1} parent=15 // pred_check
          %p195 = pneg %p106
        $region26: #{tpu_custom_call.1} parent=15 // pred_check_branch
          %197 = sbr.rel (%p195) target = $region28
        $region27: #{tpu_custom_call.1} parent=15 // pred_region
          %p198 = scmp.lt.s32.totalorder %s25, 1
          %s199 = scalar_select %p198, %s25, 1
          %s200 = smul.addr %s199, 2
          %s201 = scalar_lea.vmem %s2, %s200
        $region28: #{tpu_custom_call.1} parent=15 // pred_fallthru
          _
      $region16: #{tpu_custom_call.1} parent=5 // pred_fallthru
        _
      %p202 = scmp.le.s32.totalorder 1, %s18
      %p203 = scmp.lt.s32.totalorder %s18, 3
      %p204 = pnand %p202, %p203
      %p205 = pneg %p204
      // Predicated region
      $region29: #{tpu_custom_call.1} parent=5 // pred_check
        _
      $region30: #{tpu_custom_call.1} parent=5 // pred_check_branch
        %207 = sbr.rel (%p204) target = $region32
      $region31: #{tpu_custom_call.1} parent=5 // pred_region
        %s208 = ssub.s32 %s18, 1
        %s209 = sand.u32 %s45, 1
        %s210 = scalar_lea.sflag [#allocation6], %s209
        %s211 = sand.u32 %s45, 1
        %s212 = smul.addr %s211, 8
        %s213 = scalar_lea.vmem [#allocation5], %s212
        // Predicated region
        $region33: #{tpu_custom_call.1} parent=31 // pred_check
          %p214 = pneg %p58
        $region34: #{tpu_custom_call.1} parent=31 // pred_check_branch
          %216 = sbr.rel (%p214) target = $region36
        $region35: #{tpu_custom_call.1} parent=31 // pred_region
          %217 = dma.done %s210, 128
        $region36: #{tpu_custom_call.1} parent=31 // pred_fallthru
          _
        %s218 = sand.u32 %s73, 1
        %s219 = scalar_lea.sflag [#allocation9], %s218
        %s220 = sand.u32 %s73, 1
        %s221 = smul.addr %s220, 8
        %s222 = scalar_lea.vmem [#allocation8], %s221
        // Predicated region
        $region37: #{tpu_custom_call.1} parent=31 // pred_check
          %p223 = pneg %p86
        $region38: #{tpu_custom_call.1} parent=31 // pred_check_branch
          %225 = sbr.rel (%p223) target = $region40
        $region39: #{tpu_custom_call.1} parent=31 // pred_region
          %226 = dma.done %s219, 128
        $region40: #{tpu_custom_call.1} parent=31 // pred_fallthru
          _
        %s227 = sand.u32 %s45, 1
        %s228 = scalar_lea.sflag [#allocation6], %s227
        %s229 = sand.u32 %s45, 1
        %s230 = smul.addr %s229, 8
        %s231 = scalar_lea.vmem [#allocation5], %s230
        %p232 = pneg %p58
        %p233 = pneg %p55
        %s234 = sand.u32 %s73, 1
        %s235 = scalar_lea.sflag [#allocation9], %s234
        %s236 = sand.u32 %s73, 1
        %s237 = smul.addr %s236, 8
        %s238 = scalar_lea.vmem [#allocation8], %s237
        %p239 = pneg %p86
        %p240 = pneg %p83
        %p241 = scmp.lt.s32.totalorder %s27, 1
        %s242 = scalar_select %p241, %s27, 1
        %s243 = smul.addr %s242, 2
        %s244 = scalar_lea.vmem %s2, %s243
        %p245 = pneg %p112
        %p246 = pneg %p109
        %p247 = pneg %p138
        %p248 = pneg %p135
        %s249 = sand.u32 %s125, 1
        %s250 = scalar_lea.sflag [#allocation7], %s249
        %s251 = sand.u32 %s125, 1
        %s252 = smul.addr %s251, 8
        %s253 = scalar_lea.vmem [#allocation10], %s252
        %p254 = scmp.lt.s32.totalorder %s27, 1
        %s255 = scalar_select %p254, %s27, 1
        %s256 = smul.addr %s255, 2
        %s257 = scalar_lea.vmem %s2, %s256
        %p258 = scmp.eq.s32.totalorder %s28, 0
        // Predicated region
        $region41: #{tpu_custom_call.1} parent=31 // pred_check
          %p259 = pneg %p258
        $region42: #{tpu_custom_call.1} parent=31 // pred_check_branch
          %261 = sbr.rel (%p259) target = $region44
        $region43: #{tpu_custom_call.1} parent=31 // pred_region
          %262 = vst [vmem:[#allocation3] sm:$0x3] 0.0
          %263 = vst [vmem:[#allocation4] sm:$0x3] 0.0
          %264 = vst [vmem:[#allocation2 + $0x8] sm:$0xff] 0.0
          %265 = vst [vmem:[#allocation2 + $0x10] sm:$0xff] 0.0
          %266 = vst [vmem:[#allocation2 + $0x18] sm:$0xff] 0.0
        $region44: #{tpu_custom_call.1} parent=31 // pred_fallthru
          _
        %s267 = smul.u32 %s28, 8
        %v268 = vld [vmem:[%s257] sm:$0x3]
        %v269 = vld [vmem:[%s213] sm:$0x3]
        %v270 = vld [vmem:[%s222] sm:$0x3]
        %v271 = vsub.f32 %v269, %v270
        %v272 = vmul.f32 %v271, %v268
        %v273 = vmul.f32 %v272, %v272
        %s274 = sadd.s32 %s267, 0
        %s275 = scalar_lea.vmem [#allocation2], %s274
        %276 = vst [vmem:[%s275] sm:$0x3] %v273
        %v277 = vand.u32 2147483647, %v272
        %v278 = vadd.f32 %v277, 0.0
        %v279 = vadd.f32 %v273, 0.0
        %s280 = sadd.s32 0, 2
        %s281 = scalar_lea.vmem %s213, %s280 [#allocation5]
        %v282 = vld [vmem:[%s281] sm:$0x3]
        %s283 = scalar_lea.vmem %s222, %s280 [#allocation8]
        %v284 = vld [vmem:[%s283] sm:$0x3]
        %v285 = vsub.f32 %v282, %v284
        %v286 = vmul.f32 %v285, %v268
        %v287 = vmul.f32 %v286, %v286
        %s288 = sadd.s32 %s267, %s280
        %s289 = scalar_lea.vmem [#allocation2], %s288
        %290 = vst [vmem:[%s289] sm:$0x3] %v287
        %v291 = vand.u32 2147483647, %v286
        %v292 = vadd.f32 %v278, %v291
        %v293 = vadd.f32 %v279, %v287
        %s294 = sadd.s32 0, 4
        %s295 = scalar_lea.vmem %s213, %s294 [#allocation5]
        %v296 = vld [vmem:[%s295] sm:$0x3]
        %s297 = scalar_lea.vmem %s222, %s294 [#allocation8]
        %v298 = vld [vmem:[%s297] sm:$0x3]
        %v299 = vsub.f32 %v296, %v298
        %v300 = vmul.f32 %v299, %v268
        %v301 = vmul.f32 %v300, %v300
        %s302 = sadd.s32 %s267, %s294
        %s303 = scalar_lea.vmem [#allocation2], %s302
        %304 = vst [vmem:[%s303] sm:$0x3] %v301
        %v305 = vand.u32 2147483647, %v300
        %v306 = vadd.f32 %v292, %v305
        %v307 = vadd.f32 %v293, %v301
        %s308 = sadd.s32 0, 6
        %s309 = scalar_lea.vmem %s213, %s308 [#allocation5]
        %v310 = vld [vmem:[%s309] sm:$0x3]
        %s311 = scalar_lea.vmem %s222, %s308 [#allocation8]
        %v312 = vld [vmem:[%s311] sm:$0x3]
        %v313 = vsub.f32 %v310, %v312
        %v314 = vmul.f32 %v313, %v268
        %v315 = vmul.f32 %v314, %v314
        %s316 = sadd.s32 %s267, %s308
        %s317 = scalar_lea.vmem [#allocation2], %s316
        %318 = vst [vmem:[%s317] sm:$0x3] %v315
        %v319 = vand.u32 2147483647, %v314
        %v320 = vadd.f32 %v306, %v319
        %v321 = vadd.f32 %v307, %v315
        %v322 = vld [vmem:[#allocation3] sm:$0x3]
        %v323 = vadd.f32 %v322, %v320
        %324 = vst [vmem:[#allocation3] sm:$0x3] %v323
        %v325 = vld [vmem:[#allocation4] sm:$0x3]
        %v326 = vadd.f32 %v325, %v321
        %327 = vst [vmem:[#allocation4] sm:$0x3] %v326
        // Predicated region
        $region45: #{tpu_custom_call.1} parent=31 // pred_check
          %p328 = pneg %p258
        $region46: #{tpu_custom_call.1} parent=31 // pred_check_branch
          %330 = sbr.rel (%p328) target = $region48
        $region47: #{tpu_custom_call.1} parent=31 // pred_region
          %v331 = vld [vmem:[#allocation2] sm:$0xff]
          %v332 = vld [vmem:[#allocation2 + $0x8] sm:$0xff]
          %v333 = vld [vmem:[#allocation2 + $0x10] sm:$0xff]
          %v334 = vld [vmem:[#allocation2 + $0x18] sm:$0xff]
          %vm339 = vcmp.ge.s32.totalorder %v331, 1073741824
          %vm340 = vcmp.ge.s32.totalorder %v332, 1073741824
          %vm341 = vcmp.ge.s32.totalorder %v333, 1073741824
          %vm342 = vcmp.ge.s32.totalorder %v334, 1073741824
          %v343 = vsel %vm339, 1.0, 0.0
          %v344 = vsel %vm340, 1.0, 0.0
          %v345 = vsel %vm341, 1.0, 0.0
          %v346 = vsel %vm342, 1.0, 0.0
          %v347 = vadd.f32 %v343, 0.0
          %v348 = vadd.f32 %v344, 0.0
          %v349 = vadd.f32 %v345, 0.0
          %v350 = vadd.f32 %v346, 0.0
          %v351 = vadd.f32 %v347, %v348
          %v352 = vadd.f32 %v351, %v349
          %v353 = vadd.f32 %v352, %v350
          %354 = vadd.xlane.f32.xlu0 %v353
          %v355 = vpop.xlane.xlu0 %354
          %v356 = vrot.slane %v355, 4
          %v357 = vadd.f32 %v355, %v356
          %v358 = vrot.slane %v357, 2
          %v359 = vadd.f32 %v357, %v358
          %v360 = vrot.slane %v359, 1
          %v361 = vadd.f32 %v359, %v360
          %s362 = vtos %v361
          %p363 = scmp.ge.f32.partialorder %s362, 128.0
          %s364 = scalar_select %p363, 1073741824, 0
          %s365 = sadd.s32 %s364, 536870912
          %v366 = vstv %s365
          %vm367 = vcmp.ge.s32.totalorder %v331, %v366
          %vm368 = vcmp.ge.s32.totalorder %v332, %v366
          %vm369 = vcmp.ge.s32.totalorder %v333, %v366
          %vm370 = vcmp.ge.s32.totalorder %v334, %v366
          %v371 = vsel %vm367, 1.0, 0.0
          %v372 = vsel %vm368, 1.0, 0.0
          %v373 = vsel %vm369, 1.0, 0.0
          %v374 = vsel %vm370, 1.0, 0.0
          %v375 = vadd.f32 %v371, 0.0
          %v376 = vadd.f32 %v372, 0.0
          %v377 = vadd.f32 %v373, 0.0
          %v378 = vadd.f32 %v374, 0.0
          %v379 = vadd.f32 %v375, %v376
          %v380 = vadd.f32 %v379, %v377
          %v381 = vadd.f32 %v380, %v378
          %382 = vadd.xlane.f32.xlu0 %v381
          %v383 = vpop.xlane.xlu0 %382
          %v384 = vrot.slane %v383, 4
          %v385 = vadd.f32 %v383, %v384
          %v386 = vrot.slane %v385, 2
          %v387 = vadd.f32 %v385, %v386
          %v388 = vrot.slane %v387, 1
          %v389 = vadd.f32 %v387, %v388
          %s390 = vtos %v389
          %p391 = scmp.ge.f32.partialorder %s390, 128.0
          %s392 = scalar_select %p391, %s365, %s364
          %s393 = sadd.s32 %s392, 268435456
          %v394 = vstv %s393
          %vm395 = vcmp.ge.s32.totalorder %v331, %v394
          %vm396 = vcmp.ge.s32.totalorder %v332, %v394
          %vm397 = vcmp.ge.s32.totalorder %v333, %v394
          %vm398 = vcmp.ge.s32.totalorder %v334, %v394
          %v399 = vsel %vm395, 1.0, 0.0
          %v400 = vsel %vm396, 1.0, 0.0
          %v401 = vsel %vm397, 1.0, 0.0
          %v402 = vsel %vm398, 1.0, 0.0
          %v403 = vadd.f32 %v399, 0.0
          %v404 = vadd.f32 %v400, 0.0
          %v405 = vadd.f32 %v401, 0.0
          %v406 = vadd.f32 %v402, 0.0
          %v407 = vadd.f32 %v403, %v404
          %v408 = vadd.f32 %v407, %v405
          %v409 = vadd.f32 %v408, %v406
          %410 = vadd.xlane.f32.xlu0 %v409
          %v411 = vpop.xlane.xlu0 %410
          %v412 = vrot.slane %v411, 4
          %v413 = vadd.f32 %v411, %v412
          %v414 = vrot.slane %v413, 2
          %v415 = vadd.f32 %v413, %v414
          %v416 = vrot.slane %v415, 1
          %v417 = vadd.f32 %v415, %v416
          %s418 = vtos %v417
          %p419 = scmp.ge.f32.partialorder %s418, 128.0
          %s420 = scalar_select %p419, %s393, %s392
          %s421 = sadd.s32 %s420, 134217728
          %v422 = vstv %s421
          %vm423 = vcmp.ge.s32.totalorder %v331, %v422
          %vm424 = vcmp.ge.s32.totalorder %v332, %v422
          %vm425 = vcmp.ge.s32.totalorder %v333, %v422
          %vm426 = vcmp.ge.s32.totalorder %v334, %v422
          %v427 = vsel %vm423, 1.0, 0.0
          %v428 = vsel %vm424, 1.0, 0.0
          %v429 = vsel %vm425, 1.0, 0.0
          %v430 = vsel %vm426, 1.0, 0.0
          %v431 = vadd.f32 %v427, 0.0
          %v432 = vadd.f32 %v428, 0.0
          %v433 = vadd.f32 %v429, 0.0
          %v434 = vadd.f32 %v430, 0.0
          %v435 = vadd.f32 %v431, %v432
          %v436 = vadd.f32 %v435, %v433
          %v437 = vadd.f32 %v436, %v434
          %438 = vadd.xlane.f32.xlu0 %v437
          %v439 = vpop.xlane.xlu0 %438
          %v440 = vrot.slane %v439, 4
          %v441 = vadd.f32 %v439, %v440
          %v442 = vrot.slane %v441, 2
          %v443 = vadd.f32 %v441, %v442
          %v444 = vrot.slane %v443, 1
          %v445 = vadd.f32 %v443, %v444
          %s446 = vtos %v445
          %p447 = scmp.ge.f32.partialorder %s446, 128.0
          %s448 = scalar_select %p447, %s421, %s420
          %s449 = sadd.s32 %s448, 67108864
          %v450 = vstv %s449
          %vm451 = vcmp.ge.s32.totalorder %v331, %v450
          %vm452 = vcmp.ge.s32.totalorder %v332, %v450
          %vm453 = vcmp.ge.s32.totalorder %v333, %v450
          %vm454 = vcmp.ge.s32.totalorder %v334, %v450
          %v455 = vsel %vm451, 1.0, 0.0
          %v456 = vsel %vm452, 1.0, 0.0
          %v457 = vsel %vm453, 1.0, 0.0
          %v458 = vsel %vm454, 1.0, 0.0
          %v459 = vadd.f32 %v455, 0.0
          %v460 = vadd.f32 %v456, 0.0
          %v461 = vadd.f32 %v457, 0.0
          %v462 = vadd.f32 %v458, 0.0
          %v463 = vadd.f32 %v459, %v460
          %v464 = vadd.f32 %v463, %v461
          %v465 = vadd.f32 %v464, %v462
          %466 = vadd.xlane.f32.xlu0 %v465
          %v467 = vpop.xlane.xlu0 %466
          %v468 = vrot.slane %v467, 4
          %v469 = vadd.f32 %v467, %v468
          %v470 = vrot.slane %v469, 2
          %v471 = vadd.f32 %v469, %v470
          %v472 = vrot.slane %v471, 1
          %v473 = vadd.f32 %v471, %v472
          %s474 = vtos %v473
          %p475 = scmp.ge.f32.partialorder %s474, 128.0
          %s476 = scalar_select %p475, %s449, %s448
          %s477 = sadd.s32 %s476, 33554432
          %v478 = vstv %s477
          %vm479 = vcmp.ge.s32.totalorder %v331, %v478
          %vm480 = vcmp.ge.s32.totalorder %v332, %v478
          %vm481 = vcmp.ge.s32.totalorder %v333, %v478
          %vm482 = vcmp.ge.s32.totalorder %v334, %v478
          %v483 = vsel %vm479, 1.0, 0.0
          %v484 = vsel %vm480, 1.0, 0.0
          %v485 = vsel %vm481, 1.0, 0.0
          %v486 = vsel %vm482, 1.0, 0.0
          %v487 = vadd.f32 %v483, 0.0
          %v488 = vadd.f32 %v484, 0.0
          %v489 = vadd.f32 %v485, 0.0
          %v490 = vadd.f32 %v486, 0.0
          %v491 = vadd.f32 %v487, %v488
          %v492 = vadd.f32 %v491, %v489
          %v493 = vadd.f32 %v492, %v490
          %494 = vadd.xlane.f32.xlu0 %v493
          %v495 = vpop.xlane.xlu0 %494
          %v496 = vrot.slane %v495, 4
          %v497 = vadd.f32 %v495, %v496
          %v498 = vrot.slane %v497, 2
          %v499 = vadd.f32 %v497, %v498
          %v500 = vrot.slane %v499, 1
          %v501 = vadd.f32 %v499, %v500
          %s502 = vtos %v501
          %p503 = scmp.ge.f32.partialorder %s502, 128.0
          %s504 = scalar_select %p503, %s477, %s476
          %s505 = sadd.s32 %s504, 16777216
          %v506 = vstv %s505
          %vm507 = vcmp.ge.s32.totalorder %v331, %v506
          %vm508 = vcmp.ge.s32.totalorder %v332, %v506
          %vm509 = vcmp.ge.s32.totalorder %v333, %v506
          %vm510 = vcmp.ge.s32.totalorder %v334, %v506
          %v511 = vsel %vm507, 1.0, 0.0
          %v512 = vsel %vm508, 1.0, 0.0
          %v513 = vsel %vm509, 1.0, 0.0
          %v514 = vsel %vm510, 1.0, 0.0
          %v515 = vadd.f32 %v511, 0.0
          %v516 = vadd.f32 %v512, 0.0
          %v517 = vadd.f32 %v513, 0.0
          %v518 = vadd.f32 %v514, 0.0
          %v519 = vadd.f32 %v515, %v516
          %v520 = vadd.f32 %v519, %v517
          %v521 = vadd.f32 %v520, %v518
          %522 = vadd.xlane.f32.xlu0 %v521
          %v523 = vpop.xlane.xlu0 %522
          %v524 = vrot.slane %v523, 4
          %v525 = vadd.f32 %v523, %v524
          %v526 = vrot.slane %v525, 2
          %v527 = vadd.f32 %v525, %v526
          %v528 = vrot.slane %v527, 1
          %v529 = vadd.f32 %v527, %v528
          %s530 = vtos %v529
          %p531 = scmp.ge.f32.partialorder %s530, 128.0
          %s532 = scalar_select %p531, %s505, %s504
          %s533 = sadd.s32 %s532, 8388608
          %v534 = vstv %s533
          %vm535 = vcmp.ge.s32.totalorder %v331, %v534
          %vm536 = vcmp.ge.s32.totalorder %v332, %v534
          %vm537 = vcmp.ge.s32.totalorder %v333, %v534
          %vm538 = vcmp.ge.s32.totalorder %v334, %v534
          %v539 = vsel %vm535, 1.0, 0.0
          %v540 = vsel %vm536, 1.0, 0.0
          %v541 = vsel %vm537, 1.0, 0.0
          %v542 = vsel %vm538, 1.0, 0.0
          %v543 = vadd.f32 %v539, 0.0
          %v544 = vadd.f32 %v540, 0.0
          %v545 = vadd.f32 %v541, 0.0
          %v546 = vadd.f32 %v542, 0.0
          %v547 = vadd.f32 %v543, %v544
          %v548 = vadd.f32 %v547, %v545
          %v549 = vadd.f32 %v548, %v546
          %550 = vadd.xlane.f32.xlu0 %v549
          %v551 = vpop.xlane.xlu0 %550
          %v552 = vrot.slane %v551, 4
          %v553 = vadd.f32 %v551, %v552
          %v554 = vrot.slane %v553, 2
          %v555 = vadd.f32 %v553, %v554
          %v556 = vrot.slane %v555, 1
          %v557 = vadd.f32 %v555, %v556
          %s558 = vtos %v557
          %p559 = scmp.ge.f32.partialorder %s558, 128.0
          %s560 = scalar_select %p559, %s533, %s532
          %s561 = sadd.s32 %s560, 4194304
          %v562 = vstv %s561
          %vm563 = vcmp.ge.s32.totalorder %v331, %v562
          %vm564 = vcmp.ge.s32.totalorder %v332, %v562
          %vm565 = vcmp.ge.s32.totalorder %v333, %v562
          %vm566 = vcmp.ge.s32.totalorder %v334, %v562
          %v567 = vsel %vm563, 1.0, 0.0
          %v568 = vsel %vm564, 1.0, 0.0
          %v569 = vsel %vm565, 1.0, 0.0
          %v570 = vsel %vm566, 1.0, 0.0
          %v571 = vadd.f32 %v567, 0.0
          %v572 = vadd.f32 %v568, 0.0
          %v573 = vadd.f32 %v569, 0.0
          %v574 = vadd.f32 %v570, 0.0
          %v575 = vadd.f32 %v571, %v572
          %v576 = vadd.f32 %v575, %v573
          %v577 = vadd.f32 %v576, %v574
          %578 = vadd.xlane.f32.xlu0 %v577
          %v579 = vpop.xlane.xlu0 %578
          %v580 = vrot.slane %v579, 4
          %v581 = vadd.f32 %v579, %v580
          %v582 = vrot.slane %v581, 2
          %v583 = vadd.f32 %v581, %v582
          %v584 = vrot.slane %v583, 1
          %v585 = vadd.f32 %v583, %v584
          %s586 = vtos %v585
          %p587 = scmp.ge.f32.partialorder %s586, 128.0
          %s588 = scalar_select %p587, %s561, %s560
          %s589 = sadd.s32 %s588, 2097152
          %v590 = vstv %s589
          %vm591 = vcmp.ge.s32.totalorder %v331, %v590
          %vm592 = vcmp.ge.s32.totalorder %v332, %v590
          %vm593 = vcmp.ge.s32.totalorder %v333, %v590
          %vm594 = vcmp.ge.s32.totalorder %v334, %v590
          %v595 = vsel %vm591, 1.0, 0.0
          %v596 = vsel %vm592, 1.0, 0.0
          %v597 = vsel %vm593, 1.0, 0.0
          %v598 = vsel %vm594, 1.0, 0.0
          %v599 = vadd.f32 %v595, 0.0
          %v600 = vadd.f32 %v596, 0.0
          %v601 = vadd.f32 %v597, 0.0
          %v602 = vadd.f32 %v598, 0.0
          %v603 = vadd.f32 %v599, %v600
          %v604 = vadd.f32 %v603, %v601
          %v605 = vadd.f32 %v604, %v602
          %606 = vadd.xlane.f32.xlu0 %v605
          %v607 = vpop.xlane.xlu0 %606
          %v608 = vrot.slane %v607, 4
          %v609 = vadd.f32 %v607, %v608
          %v610 = vrot.slane %v609, 2
          %v611 = vadd.f32 %v609, %v610
          %v612 = vrot.slane %v611, 1
          %v613 = vadd.f32 %v611, %v612
          %s614 = vtos %v613
          %p615 = scmp.ge.f32.partialorder %s614, 128.0
          %s616 = scalar_select %p615, %s589, %s588
          %s617 = sadd.s32 %s616, 1048576
          %v618 = vstv %s617
          %vm619 = vcmp.ge.s32.totalorder %v331, %v618
          %vm620 = vcmp.ge.s32.totalorder %v332, %v618
          %vm621 = vcmp.ge.s32.totalorder %v333, %v618
          %vm622 = vcmp.ge.s32.totalorder %v334, %v618
          %v623 = vsel %vm619, 1.0, 0.0
          %v624 = vsel %vm620, 1.0, 0.0
          %v625 = vsel %vm621, 1.0, 0.0
          %v626 = vsel %vm622, 1.0, 0.0
          %v627 = vadd.f32 %v623, 0.0
          %v628 = vadd.f32 %v624, 0.0
          %v629 = vadd.f32 %v625, 0.0
          %v630 = vadd.f32 %v626, 0.0
          %v631 = vadd.f32 %v627, %v628
          %v632 = vadd.f32 %v631, %v629
          %v633 = vadd.f32 %v632, %v630
          %634 = vadd.xlane.f32.xlu0 %v633
          %v635 = vpop.xlane.xlu0 %634
          %v636 = vrot.slane %v635, 4
          %v637 = vadd.f32 %v635, %v636
          %v638 = vrot.slane %v637, 2
          %v639 = vadd.f32 %v637, %v638
          %v640 = vrot.slane %v639, 1
          %v641 = vadd.f32 %v639, %v640
          %s642 = vtos %v641
          %p643 = scmp.ge.f32.partialorder %s642, 128.0
          %s644 = scalar_select %p643, %s617, %s616
          %s645 = sadd.s32 %s644, 524288
          %v646 = vstv %s645
          %vm647 = vcmp.ge.s32.totalorder %v331, %v646
          %vm648 = vcmp.ge.s32.totalorder %v332, %v646
          %vm649 = vcmp.ge.s32.totalorder %v333, %v646
          %vm650 = vcmp.ge.s32.totalorder %v334, %v646
          %v651 = vsel %vm647, 1.0, 0.0
          %v652 = vsel %vm648, 1.0, 0.0
          %v653 = vsel %vm649, 1.0, 0.0
          %v654 = vsel %vm650, 1.0, 0.0
          %v655 = vadd.f32 %v651, 0.0
          %v656 = vadd.f32 %v652, 0.0
          %v657 = vadd.f32 %v653, 0.0
          %v658 = vadd.f32 %v654, 0.0
          %v659 = vadd.f32 %v655, %v656
          %v660 = vadd.f32 %v659, %v657
          %v661 = vadd.f32 %v660, %v658
          %662 = vadd.xlane.f32.xlu0 %v661
          %v663 = vpop.xlane.xlu0 %662
          %v664 = vrot.slane %v663, 4
          %v665 = vadd.f32 %v663, %v664
          %v666 = vrot.slane %v665, 2
          %v667 = vadd.f32 %v665, %v666
          %v668 = vrot.slane %v667, 1
          %v669 = vadd.f32 %v667, %v668
          %s670 = vtos %v669
          %p671 = scmp.ge.f32.partialorder %s670, 128.0
          %s672 = scalar_select %p671, %s645, %s644
          %s673 = sadd.s32 %s672, 262144
          %v674 = vstv %s673
          %vm675 = vcmp.ge.s32.totalorder %v331, %v674
          %vm676 = vcmp.ge.s32.totalorder %v332, %v674
          %vm677 = vcmp.ge.s32.totalorder %v333, %v674
          %vm678 = vcmp.ge.s32.totalorder %v334, %v674
          %v679 = vsel %vm675, 1.0, 0.0
          %v680 = vsel %vm676, 1.0, 0.0
          %v681 = vsel %vm677, 1.0, 0.0
          %v682 = vsel %vm678, 1.0, 0.0
          %v683 = vadd.f32 %v679, 0.0
          %v684 = vadd.f32 %v680, 0.0
          %v685 = vadd.f32 %v681, 0.0
          %v686 = vadd.f32 %v682, 0.0
          %v687 = vadd.f32 %v683, %v684
          %v688 = vadd.f32 %v687, %v685
          %v689 = vadd.f32 %v688, %v686
          %690 = vadd.xlane.f32.xlu0 %v689
          %v691 = vpop.xlane.xlu0 %690
          %v692 = vrot.slane %v691, 4
          %v693 = vadd.f32 %v691, %v692
          %v694 = vrot.slane %v693, 2
          %v695 = vadd.f32 %v693, %v694
          %v696 = vrot.slane %v695, 1
          %v697 = vadd.f32 %v695, %v696
          %s698 = vtos %v697
          %p699 = scmp.ge.f32.partialorder %s698, 128.0
          %s700 = scalar_select %p699, %s673, %s672
          %s701 = sadd.s32 %s700, 131072
          %v702 = vstv %s701
          %vm703 = vcmp.ge.s32.totalorder %v331, %v702
          %vm704 = vcmp.ge.s32.totalorder %v332, %v702
          %vm705 = vcmp.ge.s32.totalorder %v333, %v702
          %vm706 = vcmp.ge.s32.totalorder %v334, %v702
          %v707 = vsel %vm703, 1.0, 0.0
          %v708 = vsel %vm704, 1.0, 0.0
          %v709 = vsel %vm705, 1.0, 0.0
          %v710 = vsel %vm706, 1.0, 0.0
          %v711 = vadd.f32 %v707, 0.0
          %v712 = vadd.f32 %v708, 0.0
          %v713 = vadd.f32 %v709, 0.0
          %v714 = vadd.f32 %v710, 0.0
          %v715 = vadd.f32 %v711, %v712
          %v716 = vadd.f32 %v715, %v713
          %v717 = vadd.f32 %v716, %v714
          %718 = vadd.xlane.f32.xlu0 %v717
          %v719 = vpop.xlane.xlu0 %718
          %v720 = vrot.slane %v719, 4
          %v721 = vadd.f32 %v719, %v720
          %v722 = vrot.slane %v721, 2
          %v723 = vadd.f32 %v721, %v722
          %v724 = vrot.slane %v723, 1
          %v725 = vadd.f32 %v723, %v724
          %s726 = vtos %v725
          %p727 = scmp.ge.f32.partialorder %s726, 128.0
          %s728 = scalar_select %p727, %s701, %s700
          %s729 = sadd.s32 %s728, 65536
          %v730 = vstv %s729
          %vm731 = vcmp.ge.s32.totalorder %v331, %v730
          %vm732 = vcmp.ge.s32.totalorder %v332, %v730
          %vm733 = vcmp.ge.s32.totalorder %v333, %v730
          %vm734 = vcmp.ge.s32.totalorder %v334, %v730
          %v735 = vsel %vm731, 1.0, 0.0
          %v736 = vsel %vm732, 1.0, 0.0
          %v737 = vsel %vm733, 1.0, 0.0
          %v738 = vsel %vm734, 1.0, 0.0
          %v739 = vadd.f32 %v735, 0.0
          %v740 = vadd.f32 %v736, 0.0
          %v741 = vadd.f32 %v737, 0.0
          %v742 = vadd.f32 %v738, 0.0
          %v743 = vadd.f32 %v739, %v740
          %v744 = vadd.f32 %v743, %v741
          %v745 = vadd.f32 %v744, %v742
          %746 = vadd.xlane.f32.xlu0 %v745
          %v747 = vpop.xlane.xlu0 %746
          %v748 = vrot.slane %v747, 4
          %v749 = vadd.f32 %v747, %v748
          %v750 = vrot.slane %v749, 2
          %v751 = vadd.f32 %v749, %v750
          %v752 = vrot.slane %v751, 1
          %v753 = vadd.f32 %v751, %v752
          %s754 = vtos %v753
          %p755 = scmp.ge.f32.partialorder %s754, 128.0
          %s756 = scalar_select %p755, %s729, %s728
          %s757 = sadd.s32 %s756, 32768
          %v758 = vstv %s757
          %vm759 = vcmp.ge.s32.totalorder %v331, %v758
          %vm760 = vcmp.ge.s32.totalorder %v332, %v758
          %vm761 = vcmp.ge.s32.totalorder %v333, %v758
          %vm762 = vcmp.ge.s32.totalorder %v334, %v758
          %v763 = vsel %vm759, 1.0, 0.0
          %v764 = vsel %vm760, 1.0, 0.0
          %v765 = vsel %vm761, 1.0, 0.0
          %v766 = vsel %vm762, 1.0, 0.0
          %v767 = vadd.f32 %v763, 0.0
          %v768 = vadd.f32 %v764, 0.0
          %v769 = vadd.f32 %v765, 0.0
          %v770 = vadd.f32 %v766, 0.0
          %v771 = vadd.f32 %v767, %v768
          %v772 = vadd.f32 %v771, %v769
          %v773 = vadd.f32 %v772, %v770
          %774 = vadd.xlane.f32.xlu0 %v773
          %v775 = vpop.xlane.xlu0 %774
          %v776 = vrot.slane %v775, 4
          %v777 = vadd.f32 %v775, %v776
          %v778 = vrot.slane %v777, 2
          %v779 = vadd.f32 %v777, %v778
          %v780 = vrot.slane %v779, 1
          %v781 = vadd.f32 %v779, %v780
          %s782 = vtos %v781
          %p783 = scmp.ge.f32.partialorder %s782, 128.0
          %s784 = scalar_select %p783, %s757, %s756
          %s785 = sadd.s32 %s784, 16384
          %v786 = vstv %s785
          %vm787 = vcmp.ge.s32.totalorder %v331, %v786
          %vm788 = vcmp.ge.s32.totalorder %v332, %v786
          %vm789 = vcmp.ge.s32.totalorder %v333, %v786
          %vm790 = vcmp.ge.s32.totalorder %v334, %v786
          %v791 = vsel %vm787, 1.0, 0.0
          %v792 = vsel %vm788, 1.0, 0.0
          %v793 = vsel %vm789, 1.0, 0.0
          %v794 = vsel %vm790, 1.0, 0.0
          %v795 = vadd.f32 %v791, 0.0
          %v796 = vadd.f32 %v792, 0.0
          %v797 = vadd.f32 %v793, 0.0
          %v798 = vadd.f32 %v794, 0.0
          %v799 = vadd.f32 %v795, %v796
          %v800 = vadd.f32 %v799, %v797
          %v801 = vadd.f32 %v800, %v798
          %802 = vadd.xlane.f32.xlu0 %v801
          %v803 = vpop.xlane.xlu0 %802
          %v804 = vrot.slane %v803, 4
          %v805 = vadd.f32 %v803, %v804
          %v806 = vrot.slane %v805, 2
          %v807 = vadd.f32 %v805, %v806
          %v808 = vrot.slane %v807, 1
          %v809 = vadd.f32 %v807, %v808
          %s810 = vtos %v809
          %p811 = scmp.ge.f32.partialorder %s810, 128.0
          %s812 = scalar_select %p811, %s785, %s784
          %s813 = sadd.s32 %s812, 8192
          %v814 = vstv %s813
          %vm815 = vcmp.ge.s32.totalorder %v331, %v814
          %vm816 = vcmp.ge.s32.totalorder %v332, %v814
          %vm817 = vcmp.ge.s32.totalorder %v333, %v814
          %vm818 = vcmp.ge.s32.totalorder %v334, %v814
          %v819 = vsel %vm815, 1.0, 0.0
          %v820 = vsel %vm816, 1.0, 0.0
          %v821 = vsel %vm817, 1.0, 0.0
          %v822 = vsel %vm818, 1.0, 0.0
          %v823 = vadd.f32 %v819, 0.0
          %v824 = vadd.f32 %v820, 0.0
          %v825 = vadd.f32 %v821, 0.0
          %v826 = vadd.f32 %v822, 0.0
          %v827 = vadd.f32 %v823, %v824
          %v828 = vadd.f32 %v827, %v825
          %v829 = vadd.f32 %v828, %v826
          %830 = vadd.xlane.f32.xlu0 %v829
          %v831 = vpop.xlane.xlu0 %830
          %v832 = vrot.slane %v831, 4
          %v833 = vadd.f32 %v831, %v832
          %v834 = vrot.slane %v833, 2
          %v835 = vadd.f32 %v833, %v834
          %v836 = vrot.slane %v835, 1
          %v837 = vadd.f32 %v835, %v836
          %s838 = vtos %v837
          %p839 = scmp.ge.f32.partialorder %s838, 128.0
          %s840 = scalar_select %p839, %s813, %s812
          %s841 = sadd.s32 %s840, 4096
          %v842 = vstv %s841
          %vm843 = vcmp.ge.s32.totalorder %v331, %v842
          %vm844 = vcmp.ge.s32.totalorder %v332, %v842
          %vm845 = vcmp.ge.s32.totalorder %v333, %v842
          %vm846 = vcmp.ge.s32.totalorder %v334, %v842
          %v847 = vsel %vm843, 1.0, 0.0
          %v848 = vsel %vm844, 1.0, 0.0
          %v849 = vsel %vm845, 1.0, 0.0
          %v850 = vsel %vm846, 1.0, 0.0
          %v851 = vadd.f32 %v847, 0.0
          %v852 = vadd.f32 %v848, 0.0
          %v853 = vadd.f32 %v849, 0.0
          %v854 = vadd.f32 %v850, 0.0
          %v855 = vadd.f32 %v851, %v852
          %v856 = vadd.f32 %v855, %v853
          %v857 = vadd.f32 %v856, %v854
          %858 = vadd.xlane.f32.xlu0 %v857
          %v859 = vpop.xlane.xlu0 %858
          %v860 = vrot.slane %v859, 4
          %v861 = vadd.f32 %v859, %v860
          %v862 = vrot.slane %v861, 2
          %v863 = vadd.f32 %v861, %v862
          %v864 = vrot.slane %v863, 1
          %v865 = vadd.f32 %v863, %v864
          %s866 = vtos %v865
          %p867 = scmp.ge.f32.partialorder %s866, 128.0
          %s868 = scalar_select %p867, %s841, %s840
          %s869 = sadd.s32 %s868, 2048
          %v870 = vstv %s869
          %vm871 = vcmp.ge.s32.totalorder %v331, %v870
          %vm872 = vcmp.ge.s32.totalorder %v332, %v870
          %vm873 = vcmp.ge.s32.totalorder %v333, %v870
          %vm874 = vcmp.ge.s32.totalorder %v334, %v870
          %v875 = vsel %vm871, 1.0, 0.0
          %v876 = vsel %vm872, 1.0, 0.0
          %v877 = vsel %vm873, 1.0, 0.0
          %v878 = vsel %vm874, 1.0, 0.0
          %v879 = vadd.f32 %v875, 0.0
          %v880 = vadd.f32 %v876, 0.0
          %v881 = vadd.f32 %v877, 0.0
          %v882 = vadd.f32 %v878, 0.0
          %v883 = vadd.f32 %v879, %v880
          %v884 = vadd.f32 %v883, %v881
          %v885 = vadd.f32 %v884, %v882
          %886 = vadd.xlane.f32.xlu0 %v885
          %v887 = vpop.xlane.xlu0 %886
          %v888 = vrot.slane %v887, 4
          %v889 = vadd.f32 %v887, %v888
          %v890 = vrot.slane %v889, 2
          %v891 = vadd.f32 %v889, %v890
          %v892 = vrot.slane %v891, 1
          %v893 = vadd.f32 %v891, %v892
          %s894 = vtos %v893
          %p895 = scmp.ge.f32.partialorder %s894, 128.0
          %s896 = scalar_select %p895, %s869, %s868
          %s897 = sadd.s32 %s896, 1024
          %v898 = vstv %s897
          %vm899 = vcmp.ge.s32.totalorder %v331, %v898
          %vm900 = vcmp.ge.s32.totalorder %v332, %v898
          %vm901 = vcmp.ge.s32.totalorder %v333, %v898
          %vm902 = vcmp.ge.s32.totalorder %v334, %v898
          %v903 = vsel %vm899, 1.0, 0.0
          %v904 = vsel %vm900, 1.0, 0.0
          %v905 = vsel %vm901, 1.0, 0.0
          %v906 = vsel %vm902, 1.0, 0.0
          %v907 = vadd.f32 %v903, 0.0
          %v908 = vadd.f32 %v904, 0.0
          %v909 = vadd.f32 %v905, 0.0
          %v910 = vadd.f32 %v906, 0.0
          %v911 = vadd.f32 %v907, %v908
          %v912 = vadd.f32 %v911, %v909
          %v913 = vadd.f32 %v912, %v910
          %914 = vadd.xlane.f32.xlu0 %v913
          %v915 = vpop.xlane.xlu0 %914
          %v916 = vrot.slane %v915, 4
          %v917 = vadd.f32 %v915, %v916
          %v918 = vrot.slane %v917, 2
          %v919 = vadd.f32 %v917, %v918
          %v920 = vrot.slane %v919, 1
          %v921 = vadd.f32 %v919, %v920
          %s922 = vtos %v921
          %p923 = scmp.ge.f32.partialorder %s922, 128.0
          %s924 = scalar_select %p923, %s897, %s896
          %s925 = sadd.s32 %s924, 512
          %v926 = vstv %s925
          %vm927 = vcmp.ge.s32.totalorder %v331, %v926
          %vm928 = vcmp.ge.s32.totalorder %v332, %v926
          %vm929 = vcmp.ge.s32.totalorder %v333, %v926
          %vm930 = vcmp.ge.s32.totalorder %v334, %v926
          %v931 = vsel %vm927, 1.0, 0.0
          %v932 = vsel %vm928, 1.0, 0.0
          %v933 = vsel %vm929, 1.0, 0.0
          %v934 = vsel %vm930, 1.0, 0.0
          %v935 = vadd.f32 %v931, 0.0
          %v936 = vadd.f32 %v932, 0.0
          %v937 = vadd.f32 %v933, 0.0
          %v938 = vadd.f32 %v934, 0.0
          %v939 = vadd.f32 %v935, %v936
          %v940 = vadd.f32 %v939, %v937
          %v941 = vadd.f32 %v940, %v938
          %942 = vadd.xlane.f32.xlu0 %v941
          %v943 = vpop.xlane.xlu0 %942
          %v944 = vrot.slane %v943, 4
          %v945 = vadd.f32 %v943, %v944
          %v946 = vrot.slane %v945, 2
          %v947 = vadd.f32 %v945, %v946
          %v948 = vrot.slane %v947, 1
          %v949 = vadd.f32 %v947, %v948
          %s950 = vtos %v949
          %p951 = scmp.ge.f32.partialorder %s950, 128.0
          %s952 = scalar_select %p951, %s925, %s924
          %s953 = sadd.s32 %s952, 256
          %v954 = vstv %s953
          %vm955 = vcmp.ge.s32.totalorder %v331, %v954
          %vm956 = vcmp.ge.s32.totalorder %v332, %v954
          %vm957 = vcmp.ge.s32.totalorder %v333, %v954
          %vm958 = vcmp.ge.s32.totalorder %v334, %v954
          %v959 = vsel %vm955, 1.0, 0.0
          %v960 = vsel %vm956, 1.0, 0.0
          %v961 = vsel %vm957, 1.0, 0.0
          %v962 = vsel %vm958, 1.0, 0.0
          %v963 = vadd.f32 %v959, 0.0
          %v964 = vadd.f32 %v960, 0.0
          %v965 = vadd.f32 %v961, 0.0
          %v966 = vadd.f32 %v962, 0.0
          %v967 = vadd.f32 %v963, %v964
          %v968 = vadd.f32 %v967, %v965
          %v969 = vadd.f32 %v968, %v966
          %970 = vadd.xlane.f32.xlu0 %v969
          %v971 = vpop.xlane.xlu0 %970
          %v972 = vrot.slane %v971, 4
          %v973 = vadd.f32 %v971, %v972
          %v974 = vrot.slane %v973, 2
          %v975 = vadd.f32 %v973, %v974
          %v976 = vrot.slane %v975, 1
          %v977 = vadd.f32 %v975, %v976
          %s978 = vtos %v977
          %p979 = scmp.ge.f32.partialorder %s978, 128.0
          %s980 = scalar_select %p979, %s953, %s952
          %s981 = sadd.s32 %s980, 128
          %v982 = vstv %s981
          %vm983 = vcmp.ge.s32.totalorder %v331, %v982
          %vm984 = vcmp.ge.s32.totalorder %v332, %v982
          %vm985 = vcmp.ge.s32.totalorder %v333, %v982
          %vm986 = vcmp.ge.s32.totalorder %v334, %v982
          %v987 = vsel %vm983, 1.0, 0.0
          %v988 = vsel %vm984, 1.0, 0.0
          %v989 = vsel %vm985, 1.0, 0.0
          %v990 = vsel %vm986, 1.0, 0.0
          %v991 = vadd.f32 %v987, 0.0
          %v992 = vadd.f32 %v988, 0.0
          %v993 = vadd.f32 %v989, 0.0
          %v994 = vadd.f32 %v990, 0.0
          %v995 = vadd.f32 %v991, %v992
          %v996 = vadd.f32 %v995, %v993
          %v997 = vadd.f32 %v996, %v994
          %998 = vadd.xlane.f32.xlu0 %v997
          %v999 = vpop.xlane.xlu0 %998
          %v1000 = vrot.slane %v999, 4
          %v1001 = vadd.f32 %v999, %v1000
          %v1002 = vrot.slane %v1001, 2
          %v1003 = vadd.f32 %v1001, %v1002
          %v1004 = vrot.slane %v1003, 1
          %v1005 = vadd.f32 %v1003, %v1004
          %s1006 = vtos %v1005
          %p1007 = scmp.ge.f32.partialorder %s1006, 128.0
          %s1008 = scalar_select %p1007, %s981, %s980
          %s1009 = sadd.s32 %s1008, 64
          %v1010 = vstv %s1009
          %vm1011 = vcmp.ge.s32.totalorder %v331, %v1010
          %vm1012 = vcmp.ge.s32.totalorder %v332, %v1010
          %vm1013 = vcmp.ge.s32.totalorder %v333, %v1010
          %vm1014 = vcmp.ge.s32.totalorder %v334, %v1010
          %v1015 = vsel %vm1011, 1.0, 0.0
          %v1016 = vsel %vm1012, 1.0, 0.0
          %v1017 = vsel %vm1013, 1.0, 0.0
          %v1018 = vsel %vm1014, 1.0, 0.0
          %v1019 = vadd.f32 %v1015, 0.0
          %v1020 = vadd.f32 %v1016, 0.0
          %v1021 = vadd.f32 %v1017, 0.0
          %v1022 = vadd.f32 %v1018, 0.0
          %v1023 = vadd.f32 %v1019, %v1020
          %v1024 = vadd.f32 %v1023, %v1021
          %v1025 = vadd.f32 %v1024, %v1022
          %1026 = vadd.xlane.f32.xlu0 %v1025
          %v1027 = vpop.xlane.xlu0 %1026
          %v1028 = vrot.slane %v1027, 4
          %v1029 = vadd.f32 %v1027, %v1028
          %v1030 = vrot.slane %v1029, 2
          %v1031 = vadd.f32 %v1029, %v1030
          %v1032 = vrot.slane %v1031, 1
          %v1033 = vadd.f32 %v1031, %v1032
          %s1034 = vtos %v1033
          %p1035 = scmp.ge.f32.partialorder %s1034, 128.0
          %s1036 = scalar_select %p1035, %s1009, %s1008
          %s1037 = sadd.s32 %s1036, 32
          %v1038 = vstv %s1037
          %vm1039 = vcmp.ge.s32.totalorder %v331, %v1038
          %vm1040 = vcmp.ge.s32.totalorder %v332, %v1038
          %vm1041 = vcmp.ge.s32.totalorder %v333, %v1038
          %vm1042 = vcmp.ge.s32.totalorder %v334, %v1038
          %v1043 = vsel %vm1039, 1.0, 0.0
          %v1044 = vsel %vm1040, 1.0, 0.0
          %v1045 = vsel %vm1041, 1.0, 0.0
          %v1046 = vsel %vm1042, 1.0, 0.0
          %v1047 = vadd.f32 %v1043, 0.0
          %v1048 = vadd.f32 %v1044, 0.0
          %v1049 = vadd.f32 %v1045, 0.0
          %v1050 = vadd.f32 %v1046, 0.0
          %v1051 = vadd.f32 %v1047, %v1048
          %v1052 = vadd.f32 %v1051, %v1049
          %v1053 = vadd.f32 %v1052, %v1050
          %1054 = vadd.xlane.f32.xlu0 %v1053
          %v1055 = vpop.xlane.xlu0 %1054
          %v1056 = vrot.slane %v1055, 4
          %v1057 = vadd.f32 %v1055, %v1056
          %v1058 = vrot.slane %v1057, 2
          %v1059 = vadd.f32 %v1057, %v1058
          %v1060 = vrot.slane %v1059, 1
          %v1061 = vadd.f32 %v1059, %v1060
          %s1062 = vtos %v1061
          %p1063 = scmp.ge.f32.partialorder %s1062, 128.0
          %s1064 = scalar_select %p1063, %s1037, %s1036
          %s1065 = sadd.s32 %s1064, 16
          %v1066 = vstv %s1065
          %vm1067 = vcmp.ge.s32.totalorder %v331, %v1066
          %vm1068 = vcmp.ge.s32.totalorder %v332, %v1066
          %vm1069 = vcmp.ge.s32.totalorder %v333, %v1066
          %vm1070 = vcmp.ge.s32.totalorder %v334, %v1066
          %v1071 = vsel %vm1067, 1.0, 0.0
          %v1072 = vsel %vm1068, 1.0, 0.0
          %v1073 = vsel %vm1069, 1.0, 0.0
          %v1074 = vsel %vm1070, 1.0, 0.0
          %v1075 = vadd.f32 %v1071, 0.0
          %v1076 = vadd.f32 %v1072, 0.0
          %v1077 = vadd.f32 %v1073, 0.0
          %v1078 = vadd.f32 %v1074, 0.0
          %v1079 = vadd.f32 %v1075, %v1076
          %v1080 = vadd.f32 %v1079, %v1077
          %v1081 = vadd.f32 %v1080, %v1078
          %1082 = vadd.xlane.f32.xlu0 %v1081
          %v1083 = vpop.xlane.xlu0 %1082
          %v1084 = vrot.slane %v1083, 4
          %v1085 = vadd.f32 %v1083, %v1084
          %v1086 = vrot.slane %v1085, 2
          %v1087 = vadd.f32 %v1085, %v1086
          %v1088 = vrot.slane %v1087, 1
          %v1089 = vadd.f32 %v1087, %v1088
          %s1090 = vtos %v1089
          %p1091 = scmp.ge.f32.partialorder %s1090, 128.0
          %s1092 = scalar_select %p1091, %s1065, %s1064
          %s1093 = sadd.s32 %s1092, 8
          %v1094 = vstv %s1093
          %vm1095 = vcmp.ge.s32.totalorder %v331, %v1094
          %vm1096 = vcmp.ge.s32.totalorder %v332, %v1094
          %vm1097 = vcmp.ge.s32.totalorder %v333, %v1094
          %vm1098 = vcmp.ge.s32.totalorder %v334, %v1094
          %v1099 = vsel %vm1095, 1.0, 0.0
          %v1100 = vsel %vm1096, 1.0, 0.0
          %v1101 = vsel %vm1097, 1.0, 0.0
          %v1102 = vsel %vm1098, 1.0, 0.0
          %v1103 = vadd.f32 %v1099, 0.0
          %v1104 = vadd.f32 %v1100, 0.0
          %v1105 = vadd.f32 %v1101, 0.0
          %v1106 = vadd.f32 %v1102, 0.0
          %v1107 = vadd.f32 %v1103, %v1104
          %v1108 = vadd.f32 %v1107, %v1105
          %v1109 = vadd.f32 %v1108, %v1106
          %1110 = vadd.xlane.f32.xlu0 %v1109
          %v1111 = vpop.xlane.xlu0 %1110
          %v1112 = vrot.slane %v1111, 4
          %v1113 = vadd.f32 %v1111, %v1112
          %v1114 = vrot.slane %v1113, 2
          %v1115 = vadd.f32 %v1113, %v1114
          %v1116 = vrot.slane %v1115, 1
          %v1117 = vadd.f32 %v1115, %v1116
          %s1118 = vtos %v1117
          %p1119 = scmp.ge.f32.partialorder %s1118, 128.0
          %s1120 = scalar_select %p1119, %s1093, %s1092
          %s1121 = sadd.s32 %s1120, 4
          %v1122 = vstv %s1121
          %vm1123 = vcmp.ge.s32.totalorder %v331, %v1122
          %vm1124 = vcmp.ge.s32.totalorder %v332, %v1122
          %vm1125 = vcmp.ge.s32.totalorder %v333, %v1122
          %vm1126 = vcmp.ge.s32.totalorder %v334, %v1122
          %v1127 = vsel %vm1123, 1.0, 0.0
          %v1128 = vsel %vm1124, 1.0, 0.0
          %v1129 = vsel %vm1125, 1.0, 0.0
          %v1130 = vsel %vm1126, 1.0, 0.0
          %v1131 = vadd.f32 %v1127, 0.0
          %v1132 = vadd.f32 %v1128, 0.0
          %v1133 = vadd.f32 %v1129, 0.0
          %v1134 = vadd.f32 %v1130, 0.0
          %v1135 = vadd.f32 %v1131, %v1132
          %v1136 = vadd.f32 %v1135, %v1133
          %v1137 = vadd.f32 %v1136, %v1134
          %1138 = vadd.xlane.f32.xlu0 %v1137
          %v1139 = vpop.xlane.xlu0 %1138
          %v1140 = vrot.slane %v1139, 4
          %v1141 = vadd.f32 %v1139, %v1140
          %v1142 = vrot.slane %v1141, 2
          %v1143 = vadd.f32 %v1141, %v1142
          %v1144 = vrot.slane %v1143, 1
          %v1145 = vadd.f32 %v1143, %v1144
          %s1146 = vtos %v1145
          %p1147 = scmp.ge.f32.partialorder %s1146, 128.0
          %s1148 = scalar_select %p1147, %s1121, %s1120
          %s1149 = sadd.s32 %s1148, 2
          %v1150 = vstv %s1149
          %vm1151 = vcmp.ge.s32.totalorder %v331, %v1150
          %vm1152 = vcmp.ge.s32.totalorder %v332, %v1150
          %vm1153 = vcmp.ge.s32.totalorder %v333, %v1150
          %vm1154 = vcmp.ge.s32.totalorder %v334, %v1150
          %v1155 = vsel %vm1151, 1.0, 0.0
          %v1156 = vsel %vm1152, 1.0, 0.0
          %v1157 = vsel %vm1153, 1.0, 0.0
          %v1158 = vsel %vm1154, 1.0, 0.0
          %v1159 = vadd.f32 %v1155, 0.0
          %v1160 = vadd.f32 %v1156, 0.0
          %v1161 = vadd.f32 %v1157, 0.0
          %v1162 = vadd.f32 %v1158, 0.0
          %v1163 = vadd.f32 %v1159, %v1160
          %v1164 = vadd.f32 %v1163, %v1161
          %v1165 = vadd.f32 %v1164, %v1162
          %1166 = vadd.xlane.f32.xlu0 %v1165
          %v1167 = vpop.xlane.xlu0 %1166
          %v1168 = vrot.slane %v1167, 4
          %v1169 = vadd.f32 %v1167, %v1168
          %v1170 = vrot.slane %v1169, 2
          %v1171 = vadd.f32 %v1169, %v1170
          %v1172 = vrot.slane %v1171, 1
          %v1173 = vadd.f32 %v1171, %v1172
          %s1174 = vtos %v1173
          %p1175 = scmp.ge.f32.partialorder %s1174, 128.0
          %s1176 = scalar_select %p1175, %s1149, %s1148
          %s1177 = sadd.s32 %s1176, 1
          %v1178 = vstv %s1177
          %vm1179 = vcmp.ge.s32.totalorder %v331, %v1178
          %vm1180 = vcmp.ge.s32.totalorder %v332, %v1178
          %vm1181 = vcmp.ge.s32.totalorder %v333, %v1178
          %vm1182 = vcmp.ge.s32.totalorder %v334, %v1178
          %v1183 = vsel %vm1179, 1.0, 0.0
          %v1184 = vsel %vm1180, 1.0, 0.0
          %v1185 = vsel %vm1181, 1.0, 0.0
          %v1186 = vsel %vm1182, 1.0, 0.0
          %v1187 = vadd.f32 %v1183, 0.0
          %v1188 = vadd.f32 %v1184, 0.0
          %v1189 = vadd.f32 %v1185, 0.0
          %v1190 = vadd.f32 %v1186, 0.0
          %v1191 = vadd.f32 %v1187, %v1188
          %v1192 = vadd.f32 %v1191, %v1189
          %v1193 = vadd.f32 %v1192, %v1190
          %1194 = vadd.xlane.f32.xlu0 %v1193
          %v1195 = vpop.xlane.xlu0 %1194
          %v1196 = vrot.slane %v1195, 4
          %v1197 = vadd.f32 %v1195, %v1196
          %v1198 = vrot.slane %v1197, 2
          %v1199 = vadd.f32 %v1197, %v1198
          %v1200 = vrot.slane %v1199, 1
          %v1201 = vadd.f32 %v1199, %v1200
          %s1202 = vtos %v1201
          %p1203 = scmp.ge.f32.partialorder %s1202, 128.0
          %s1204 = scalar_select %p1203, %s1177, %s1176
          %v1205 = vstv %s1204
          %vm1206 = vcmp.ge.s32.totalorder %v331, %v1205
          %vm1207 = vcmp.ge.s32.totalorder %v332, %v1205
          %vm1208 = vcmp.ge.s32.totalorder %v333, %v1205
          %vm1209 = vcmp.ge.s32.totalorder %v334, %v1205
          %v1210 = vsel %vm1206, %v331, 0.0
          %v1211 = vsel %vm1207, %v332, 0.0
          %v1212 = vsel %vm1208, %v333, 0.0
          %v1213 = vsel %vm1209, %v334, 0.0
          %v1214 = vadd.f32 %v1210, 0.0
          %v1215 = vadd.f32 %v1211, 0.0
          %v1216 = vadd.f32 %v1212, 0.0
          %v1217 = vadd.f32 %v1213, 0.0
          %v1218 = vsel %vm1206, 1.0, 0.0
          %v1219 = vsel %vm1207, 1.0, 0.0
          %v1220 = vsel %vm1208, 1.0, 0.0
          %v1221 = vsel %vm1209, 1.0, 0.0
          %v1222 = vadd.f32 %v1218, 0.0
          %v1223 = vadd.f32 %v1219, 0.0
          %v1224 = vadd.f32 %v1220, 0.0
          %v1225 = vadd.f32 %v1221, 0.0
          %v1226 = vadd.f32 %v1214, %v1215
          %v1227 = vadd.f32 %v1226, %v1216
          %v1228 = vadd.f32 %v1227, %v1217
          %1229 = vadd.xlane.f32.xlu0 %v1228
          %v1230 = vpop.xlane.xlu0 %1229
          %v1231 = vrot.slane %v1230, 4
          %v1232 = vadd.f32 %v1230, %v1231
          %v1233 = vrot.slane %v1232, 2
          %v1234 = vadd.f32 %v1232, %v1233
          %v1235 = vrot.slane %v1234, 1
          %v1236 = vadd.f32 %v1234, %v1235
          %s1237 = vtos %v1236
          %v1238 = vadd.f32 %v1222, %v1223
          %v1239 = vadd.f32 %v1238, %v1224
          %v1240 = vadd.f32 %v1239, %v1225
          %1241 = vadd.xlane.f32.xlu0 %v1240
          %v1242 = vpop.xlane.xlu0 %1241
          %v1243 = vrot.slane %v1242, 4
          %v1244 = vadd.f32 %v1242, %v1243
          %v1245 = vrot.slane %v1244, 2
          %v1246 = vadd.f32 %v1244, %v1245
          %v1247 = vrot.slane %v1246, 1
          %v1248 = vadd.f32 %v1246, %v1247
          %s1249 = vtos %v1248
          %s1251 = vtos %v1205
          %s1252 = ssub.f32 %s1249, 128.0
          %s1253 = smul.f32 %s1252, %s1251
          %s1254 = ssub.f32 %s1237, %s1253
          %v1255 = vld [vmem:[#allocation3] sm:$0x3]
          %vm1256 = vcmask 1041408
          %v1257 = vsel %vm1256, %v1255, 0.0
          %1258 = vadd.xlane.f32.xlu0 %v1257
          %v1259 = vpop.xlane.xlu0 %1258
          %v1260 = vrot.slane %v1259, 4
          %v1261 = vadd.f32 %v1259, %v1260
          %v1262 = vrot.slane %v1261, 2
          %v1263 = vadd.f32 %v1261, %v1262
          %v1264 = vrot.slane %v1263, 1
          %v1265 = vadd.f32 %v1263, %v1264
          %s1266 = vtos %v1265
          %v1267 = vld [vmem:[#allocation4] sm:$0x3]
          %v1268 = vsel %vm1256, %v1267, 0.0
          %1269 = vadd.xlane.f32.xlu0 %v1268
          %v1270 = vpop.xlane.xlu0 %1269
          %v1271 = vrot.slane %v1270, 4
          %v1272 = vadd.f32 %v1270, %v1271
          %v1273 = vrot.slane %v1272, 2
          %v1274 = vadd.f32 %v1272, %v1273
          %v1275 = vrot.slane %v1274, 1
          %v1276 = vadd.f32 %v1274, %v1275
          %s1277 = vtos %v1276
          %v1278 = vlaneseq
          %v1279 = vshrl.u32 %v1278, 7
          %v1280 = vlaneseq
          %v1281 = vand.u32 %v1280, 127
          %vm1282 = vcmp.eq.s32.totalorder %v1279, 0
          %vm1283 = vcmp.eq.s32.totalorder %v1281, 0
          %vm1284 = vmand %vm1282, %vm1283
          %v1285 = vstv %s1266
          %v1286 = vsel %vm1284, %v1285, 0.0
          %vm1287 = vcmp.eq.s32.totalorder %v1281, 1
          %vm1288 = vmand %vm1282, %vm1287
          %v1289 = vstv %s1277
          %v1290 = vsel %vm1288, %v1289, %v1286
          %vm1291 = vcmp.eq.s32.totalorder %v1281, 2
          %vm1292 = vmand %vm1282, %vm1291
          %v1293 = vstv %s1254
          %v1294 = vsel %vm1292, %v1293, %v1290
          %1295 = vst [vmem:[%s253] sm:$0xff] %v1294
        $region48: #{tpu_custom_call.1} parent=31 // pred_fallthru
          _
        %s1296 = sand.u32 %s125, 1
        %s1297 = scalar_lea.sflag [#allocation7], %s1296
        %s1298 = sand.u32 %s125, 1
        %s1299 = smul.addr %s1298, 8
        %s1300 = scalar_lea.vmem [#allocation10], %s1299
        // Predicated region
        $region49: #{tpu_custom_call.1} parent=31 // pred_check
          %p1301 = pneg %p135
        $region50: #{tpu_custom_call.1} parent=31 // pred_check_branch
          %1303 = sbr.rel (%p1301) target = $region52
        $region51: #{tpu_custom_call.1} parent=31 // pred_region
          %s1305 = ssub.s32 128, 128
          %1306 = vsyncadd %s1297, %s1305
          %s1307 = smul.addr %s27, 128
          %s1308 = scalar_lea.hbm %s3, %s1307
          %s1310 = sshll.u32 %s1300, 4
          %s1311 = int_to_ptr.vmem [resolvable:$true] %s1310
          %1313 = dma.vmem_to_hbm [thread:$0]  %s1311, 128, %s1308, %s1297
        $region52: #{tpu_custom_call.1} parent=31 // pred_fallthru
          _
      $region32: #{tpu_custom_call.1} parent=5 // pred_fallthru
        _
      %p1314 = scmp.le.s32.totalorder 2, %s18
      // Predicated region
      $region53: #{tpu_custom_call.1} parent=5 // pred_check
        %p1315 = pneg %p1314
      $region54: #{tpu_custom_call.1} parent=5 // pred_check_branch
        %1317 = sbr.rel (%p1315) target = $region56
      $region55: #{tpu_custom_call.1} parent=5 // pred_region
        %s1318 = ssub.s32 %s18, 2
        // Predicated region
        $region57: #{tpu_custom_call.1} parent=55 // pred_check
          %p1319 = pneg %p141
        $region58: #{tpu_custom_call.1} parent=55 // pred_check_branch
          %1321 = sbr.rel (%p1319) target = $region60
        $region59: #{tpu_custom_call.1} parent=55 // pred_region
          %s1322 = sand.u32 %s126, 1
          %s1323 = scalar_lea.sflag [#allocation7], %s1322
          %s1324 = sand.u32 %s126, 1
          %s1325 = smul.addr %s1324, 8
          %s1326 = scalar_lea.vmem [#allocation10], %s1325
          %1327 = dma.done %s1323, 128
        $region60: #{tpu_custom_call.1} parent=55 // pred_fallthru
          _
      $region56: #{tpu_custom_call.1} parent=5 // pred_fallthru
        _
    $region6: #{tpu_custom_call.1} parent=1 // loop_footer
      %s22 = sadd.s32 1, %s18
    $region7: #{tpu_custom_call.1} parent=1 // loop_footer_branch
      %17 = sbr.rel target = $region3
    $region8: #{tpu_custom_call.1} parent=1 // loop_exit
      _
    %1328 = vsyncpa [#allocation6], 1
    %s1329 = scalar_lea.sflag [#allocation6], 1
    %1330 = vsyncpa %s1329, 1
    %1331 = vsyncpa [#allocation9], 1
    %s1332 = scalar_lea.sflag [#allocation9], 1
    %1333 = vsyncpa %s1332, 1
    %1334 = vsyncpa [#allocation7], 1
    %s1335 = scalar_lea.sflag [#allocation7], 1
    %1336 = vsyncpa %s1335, 1

</llo_original>
